<compile_context>
chip_gen: v6e
topology: v6e:2x2x1
jax: 0.10.0
libtpu: 0.0.40
codegen_flags: <defaults>
</compile_context>

<pallas_src>
import math
from functools import partial

import jax
import jax.numpy as jnp
import numpy as np
from jax.experimental import pallas as pl
from jax.experimental.pallas import tpu as pltpu

_OUT_LANES = 128      # lane-dense width of the final class-score store
_MAX_ROW_TILE = 512   # row / contraction tile for large N (>=512 ~ 85% HBM roofline)


def _vmem_limit_bytes(blocks):
    """Explicit VMEM budget: assume double buffering of every block + slack."""
    total = sum(2 * math.prod(s) * np.dtype(d).itemsize for s, d in blocks)
    return int(min(max(total + (2 << 20), 4 << 20), 64 << 20))


# ----------------------------------------------------------------------------
# Kernels
# ----------------------------------------------------------------------------
def _sage_epilogue(acc, hm_ref, ws_ref, wa_ref, b_ref):
    """Finish one SAGEConvCat_weighted layer given the A@h accumulator."""
    # leaky_relu from message_and_aggregate (negative_slope=0.01).
    agg = jnp.where(acc >= 0.0, acc, 0.01 * acc)
    # Split matmul replaces concat([h, agg], -1) @ W  (no cross-lane movement).
    h = (jnp.dot(hm_ref[...].astype(jnp.float32), ws_ref[...],
                 preferred_element_type=jnp.float32)
         + jnp.dot(agg, wa_ref[...], preferred_element_type=jnp.float32)
         + b_ref[...])
    # model-level torch.relu after each graph conv layer.
    return jnp.maximum(h, 0.0)


def _sage_conv_kernel(a_ref, hk_ref, hm_ref, ws_ref, wa_ref, b_ref,
                      o_ref, acc_ref):
    """One SAGE layer: rows tiled (parallel), contraction over source nodes (k)."""
    k = pl.program_id(1)

    @pl.when(k == 0)
    def _():
        acc_ref[...] = jnp.zeros_like(acc_ref)

    # Weighted-mean neighbor aggregation (bf16 x bf16 -> f32 on the MXU).
    acc_ref[...] += jnp.dot(a_ref[...], hk_ref[...],
                            preferred_element_type=jnp.float32)

    @pl.when(k == pl.num_programs(1) - 1)
    def _():
        o_ref[...] = _sage_epilogue(acc_ref[...], hm_ref, ws_ref, wa_ref,
                                    b_ref).astype(o_ref.dtype)


def _sage_conv_mlp_kernel(a_ref, hk_ref, hm_ref, ws_ref, wa_ref, b_ref,
                          mask_ref, w3_ref, b3_ref, w4_ref, b4_ref,
                          o_ref, acc_ref):
    """Second SAGE layer fused with dropout + lin1 + relu + lin2 epilogue."""
    k = pl.program_id(1)

    @pl.when(k == 0)
    def _():
        acc_ref[...] = jnp.zeros_like(acc_ref)

    acc_ref[...] += jnp.dot(a_ref[...], hk_ref[...],
                            preferred_element_type=jnp.float32)

    @pl.when(k == pl.num_programs(1) - 1)
    def _():
        h = _sage_epilogue(acc_ref[...], hm_ref, ws_ref, wa_ref, b_ref)
        # F.dropout(p=0.5) via pre-scaled mask (training-mode forward).
        h = h * mask_ref[...]
        # lin1 + relu
        h = jnp.maximum(
            jnp.dot(h, w3_ref[...], preferred_element_type=jnp.float32)
            + b3_ref[...], 0.0)
        # lin2 (zero-padded to 128 lanes -> lane-dense store).
        o_ref[...] = (jnp.dot(h, w4_ref[...], preferred_element_type=jnp.float32)
                      + b4_ref[...])


# ----------------------------------------------------------------------------
# pallas_call wrappers
# ----------------------------------------------------------------------------
def _sage_conv_call(a_bf, h_bf, ws, wa, b, *, out_dtype, tm, tk):
    n = a_bf.shape[0]
    f_in = h_bf.shape[1]
    f_out = ws.shape[1]
    gm, gk = n // tm, n // tk

    blocks = [((tm, tk), jnp.bfloat16), ((tk, f_in), jnp.bfloat16),
              ((tm, f_in), jnp.bfloat16), ((f_in, f_out), jnp.float32),
              ((f_in, f_out), jnp.float32), ((1, f_out), jnp.float32),
              ((tm, f_out), out_dtype), ((tm, f_in), jnp.float32)]

    return pl.pallas_call(
        _sage_conv_kernel,
        out_shape=jax.ShapeDtypeStruct((n, f_out), out_dtype),
        grid=(gm, gk),
        in_specs=[
            pl.BlockSpec((tm, tk), lambda i, k: (i, k)),      # A_norm tile
            pl.BlockSpec((tk, f_in), lambda i, k: (k, 0)),    # h (contraction slice)
            pl.BlockSpec((tm, f_in), lambda i, k: (i, 0)),    # h (self rows)
            pl.BlockSpec((f_in, f_out), lambda i, k: (0, 0)), # W_self (resident)
            pl.BlockSpec((f_in, f_out), lambda i, k: (0, 0)), # W_agg  (resident)
            pl.BlockSpec((1, f_out), lambda i, k: (0, 0)),    # bias   (resident)
        ],
        out_specs=pl.BlockSpec((tm, f_out), lambda i, k: (i, 0)),
        scratch_shapes=[pltpu.VMEM((tm, f_in), jnp.float32)],
        compiler_params=pltpu.CompilerParams(
            dimension_semantics=("parallel", "arbitrary"),
            vmem_limit_bytes=_vmem_limit_bytes(blocks)),
    )(a_bf, h_bf, h_bf, ws, wa, b)


def _sage_conv_mlp_call(a_bf, h_bf, ws, wa, b, mask, w3, b3, w4p, b4p, *, tm, tk):
    n = a_bf.shape[0]
    f_in = h_bf.shape[1]
    f_out = ws.shape[1]
    l1 = w3.shape[1]
    out_l = w4p.shape[1]
    gm, gk = n // tm, n // tk

    blocks = [((tm, tk), jnp.bfloat16), ((tk, f_in), jnp.bfloat16),
              ((tm, f_in), jnp.bfloat16), ((f_in, f_out), jnp.float32),
              ((f_in, f_out), jnp.float32), ((1, f_out), jnp.float32),
              ((tm, f_out), jnp.float32), ((f_out, l1), jnp.float32),
              ((1, l1), jnp.float32), ((l1, out_l), jnp.float32),
              ((1, out_l), jnp.float32), ((tm, out_l), jnp.float32),
              ((tm, f_in), jnp.float32)]

    return pl.pallas_call(
        _sage_conv_mlp_kernel,
        out_shape=jax.ShapeDtypeStruct((n, out_l), jnp.float32),
        grid=(gm, gk),
        in_specs=[
            pl.BlockSpec((tm, tk), lambda i, k: (i, k)),       # A_norm tile
            pl.BlockSpec((tk, f_in), lambda i, k: (k, 0)),     # h1 (contraction slice)
            pl.BlockSpec((tm, f_in), lambda i, k: (i, 0)),     # h1 (self rows)
            pl.BlockSpec((f_in, f_out), lambda i, k: (0, 0)),  # conv2 W_self
            pl.BlockSpec((f_in, f_out), lambda i, k: (0, 0)),  # conv2 W_agg
            pl.BlockSpec((1, f_out), lambda i, k: (0, 0)),     # conv2 bias
            pl.BlockSpec((tm, f_out), lambda i, k: (i, 0)),    # dropout mask rows
            pl.BlockSpec((f_out, l1), lambda i, k: (0, 0)),    # lin1 W
            pl.BlockSpec((1, l1), lambda i, k: (0, 0)),        # lin1 b
            pl.BlockSpec((l1, out_l), lambda i, k: (0, 0)),    # lin2 W (padded)
            pl.BlockSpec((1, out_l), lambda i, k: (0, 0)),     # lin2 b (padded)
        ],
        out_specs=pl.BlockSpec((tm, out_l), lambda i, k: (i, 0)),
        scratch_shapes=[pltpu.VMEM((tm, f_in), jnp.float32)],
        compiler_params=pltpu.CompilerParams(
            dimension_semantics=("parallel", "arbitrary"),
            vmem_limit_bytes=_vmem_limit_bytes(blocks)),
    )(a_bf, h_bf, h_bf, ws, wa, b, mask, w3, b3, w4p, b4p)


# ----------------------------------------------------------------------------
# Parameter prep (done once, hoisted out of the hot path) + jitted forward
# ----------------------------------------------------------------------------
def prepare_params(params, out_lanes=_OUT_LANES):
    """Split SAGE weights into self/agg halves, reshape biases, pad lin2 to a
    lane-dense output width.  Weight layout (transposed vs. PyTorch):
      conv{1,2}_w: [2*F_in, F_out], lin{1,2}_w: [F_in, F_out]."""
    f0 = params["conv1_w"].shape[0] // 2
    f1 = params["conv1_w"].shape[1]
    f1b = params["conv2_w"].shape[0] // 2
    f2 = params["conv2_w"].shape[1]
    l1 = params["lin1_w"].shape[1]
    nc = params["lin2_w"].shape[1]
    prep = {
        "conv1_w_self": params["conv1_w"][:f0],
        "conv1_w_agg": params["conv1_w"][f0:],
        "conv1_b": params["conv1_b"].reshape(1, f1),
        "conv2_w_self": params["conv2_w"][:f1b],
        "conv2_w_agg": params["conv2_w"][f1b:],
        "conv2_b": params["conv2_b"].reshape(1, f2),
        "lin1_w": params["lin1_w"],
        "lin1_b": params["lin1_b"].reshape(1, l1),
        "lin2_w_pad": jnp.zeros((l1, out_lanes), jnp.float32)
                        .at[:, :nc].set(params["lin2_w"]),
        "lin2_b_pad": jnp.zeros((1, out_lanes), jnp.float32)
                        .at[:, :nc].set(params["lin2_b"].reshape(1, nc)),
    }
    return prep, nc


@partial(jax.jit, static_argnames=("num_classes",))
def gcn_classification_weighted_forward(x, a_norm, prep, dropout_mask,
                                         num_classes):
    """Forward pass: two tiled/fused pallas_calls (conv1; conv2+MLP head)."""
    n = x.shape[0]
    tm = tk = n if n <= _MAX_ROW_TILE else _MAX_ROW_TILE
    if n % tm != 0:
        raise ValueError("N must be a multiple of the row tile "
                         f"({tm}); got N={n}.")  # TODO(synk): ragged-N masking

    a_bf = a_norm.astype(jnp.bfloat16)   # halves the N^2 DMA bytes, 2x MXU rate
    x_bf = x.astype(jnp.bfloat16)

    h1 = _sage_conv_call(a_bf, x_bf,
                         prep["conv1_w_self"], prep["conv1_w_agg"],
                         prep["conv1_b"],
                         out_dtype=jnp.bfloat16, tm=tm, tk=tk)

    out_padded = _sage_conv_mlp_call(
        a_bf, h1,
        prep["conv2_w_self"], prep["conv2_w_agg"], prep["conv2_b"],
        dropout_mask,
        prep["lin1_w"], prep["lin1_b"],
        prep["lin2_w_pad"], prep["lin2_b_pad"],
        tm=tm, tk=tk)

    return out_padded[:, :num_classes]


# ----------------------------------------------------------------------------
# Pure-JAX reference (mirrors the kernel's bf16 casts for a tight check)
# ----------------------------------------------------------------------------
def _ref_forward(x, a_norm, params, dropout_mask):
    a = a_norm.astype(jnp.bfloat16).astype(jnp.float32)

    def conv(h_in, w, b):
        h_bf = h_in.astype(jnp.bfloat16).astype(jnp.float32)
        agg = a @ h_bf
        agg = jnp.where(agg >= 0.0, agg, 0.01 * agg)
        h = jnp.concatenate([h_bf, agg], -1) @ w + b
        return jnp.maximum(h, 0.0)

    h = conv(x, params["conv1_w"], params["conv1_b"])
    h = conv(h, params["conv2_w"], params["conv2_b"])
    h = h * dropout_mask
    h = jnp.maximum(h @ params["lin1_w"] + params["lin1_b"], 0.0)
    return h @ params["lin2_w"] + params["lin2_b"]


# ----------------------------------------------------------------------------
# Deterministic parameter / input construction
# ----------------------------------------------------------------------------
def _linear_init(key, fan_in, fan_out):
    # PyTorch nn.Linear default: U(-1/sqrt(fan_in), 1/sqrt(fan_in))
    kw, kb = jax.random.split(key)
    bound = 1.0 / jnp.sqrt(jnp.float32(fan_in))
    w = jax.random.uniform(kw, (fan_in, fan_out), jnp.float32, -bound, bound)
    b = jax.random.uniform(kb, (fan_out,), jnp.float32, -bound, bound)
    return w, b


if __name__ == "__main__":
    key = jax.random.PRNGKey(0)

    # Small config
    N = 64                               # num_nodes
    NUM_FEAT = 16
    conv_sizes = [NUM_FEAT, 32, 32]      # graph_conv_layer_sizes
    lin_sizes = [32, 32, 2]              # lin_hidden_sizes, num_classes = 2
    E = 256                              # number of edges
    P_DROP = 0.5

    (k_x, k_src, k_dst, k_w, k_c1, k_c2, k_l1, k_l2, k_drop) = jax.random.split(key, 9)

    # Node features
    x = jax.random.normal(k_x, (N, NUM_FEAT), jnp.float32)

    # Random directed edge list + edge weights (edge_attr)
    src = jax.random.randint(k_src, (E,), 0, N)
    dst = jax.random.randint(k_dst, (E,), 0, N)
    edge_attr = jax.random.uniform(k_w, (E,), jnp.float32, 0.1, 1.0)

    # Dense weighted adjacency (row = target node).  Duplicate edges are
    # coalesced (summed) and the mean normalization divides by the per-row
    # *stored-nonzero* count, matching torch_sparse.matmul(reduce='mean').
    A = jnp.zeros((N, N), jnp.float32).at[dst, src].add(edge_attr)
    deg = jnp.sum((A != 0.0).astype(jnp.float32), axis=1)
    a_norm = A / jnp.maximum(deg, 1.0)[:, None]

    # Parameters (deterministic). SAGE lin_l has input size 2 * in_channels.
    params = {}
    params["conv1_w"], params["conv1_b"] = _linear_init(k_c1, 2 * conv_sizes[0], conv_sizes[1])
    params["conv2_w"], params["conv2_b"] = _linear_init(k_c2, 2 * conv_sizes[1], conv_sizes[2])
    params["lin1_w"], params["lin1_b"] = _linear_init(k_l1, lin_sizes[0], lin_sizes[1])
    params["lin2_w"], params["lin2_b"] = _linear_init(k_l2, lin_sizes[1], lin_sizes[2])

    prep, num_classes = prepare_params(params)

    # Dropout mask (inverse scaled), p = 0.5, applied before lin1 as in
    # forward() (F.dropout default training=True, mirroring the module).
    keep = jax.random.bernoulli(k_drop, 1.0 - P_DROP, (N, conv_sizes[2]))
    dropout_mask = keep.astype(jnp.float32) / (1.0 - P_DROP)

    scores = gcn_classification_weighted_forward(x, a_norm, prep, dropout_mask,
                                                  num_classes=num_classes)
    scores = jax.block_until_ready(scores)

    assert scores.shape == (N, lin_sizes[-1])
    assert scores.dtype == jnp.float32
    assert bool(jnp.all(jnp.isfinite(scores)))

    # Numerical sanity check against a plain-JAX reference.
    ref = _ref_forward(x, a_norm, params, dropout_mask)
    assert bool(jnp.allclose(scores, ref, rtol=1e-2, atol=1e-2))

    print("KERNEL_OK")
</pallas_src>

<mosaic_0001>
module attributes {stable_mosaic.version = 11 : i64} {
  func.func @_sage_conv_kernel(%arg0: i32, %arg1: i32, %arg2: memref<64x64xbf16, #tpu.memory_space<vmem>>, %arg3: memref<64x16xbf16, #tpu.memory_space<vmem>>, %arg4: memref<64x16xbf16, #tpu.memory_space<vmem>>, %arg5: memref<16x32xf32, #tpu.memory_space<vmem>>, %arg6: memref<16x32xf32, #tpu.memory_space<vmem>>, %arg7: memref<1x32xf32, #tpu.memory_space<vmem>>, %arg8: memref<64x32xbf16, #tpu.memory_space<vmem>>, %arg9: memref<64x16xf32, #tpu.memory_space<vmem>>) attributes {dimension_semantics = [#tpu.dimension_semantics<parallel>, #tpu.dimension_semantics<arbitrary>], iteration_bounds = array<i64: 1, 1>, scalar_prefetch = 0 : i64, scratch_operands = 1 : i64, tpu.core_type = #tpu.core_type<tc>, window_params = [{transform_indices = @transform_0, window_bounds = array<i64: 64, 64>}, {transform_indices = @transform_1, window_bounds = array<i64: 64, 16>}, {transform_indices = @transform_2, window_bounds = array<i64: 64, 16>}, {pipeline_mode = #tpu.pipeline_mode<synchronous>, transform_indices = @transform_3, window_bounds = array<i64: 16, 32>}, {pipeline_mode = #tpu.pipeline_mode<synchronous>, transform_indices = @transform_4, window_bounds = array<i64: 16, 32>}, {pipeline_mode = #tpu.pipeline_mode<synchronous>, transform_indices = @transform_5, window_bounds = array<i64: 1, 32>}, {transform_indices = @transform_6, window_bounds = array<i64: 64, 32>}]} {
    %c0_i32 = arith.constant 0 : i32
    %0 = arith.cmpi eq, %arg1, %c0_i32 : i32
    %1 = arith.extui %0 : i1 to i32
    %c0_i32_0 = arith.constant 0 : i32
    %2 = arith.cmpi ne, %1, %c0_i32_0 : i32
    scf.if %2 {
      %cst_10 = arith.constant 0.000000e+00 : f32
      %12 = vector.broadcast %cst_10 : f32 to vector<64x16xf32>
      %c0_11 = arith.constant 0 : index
      %c0_12 = arith.constant 0 : index
      %13 = vector.load %arg9[%c0_11, %c0_12] : memref<64x16xf32, #tpu.memory_space<vmem>>, vector<64x16xf32>
      tpu.vector_store %arg9[%c0_11, %c0_12], %12 {strides = array<i32>} : memref<64x16xf32, #tpu.memory_space<vmem>>, vector<64x16xf32>,
    } else {
    }
    %c0 = arith.constant 0 : index
    %c0_1 = arith.constant 0 : index
    %3 = vector.load %arg9[%c0, %c0_1] : memref<64x16xf32, #tpu.memory_space<vmem>>, vector<64x16xf32>
    %c0_2 = arith.constant 0 : index
    %c0_3 = arith.constant 0 : index
    %4 = vector.load %arg2[%c0_2, %c0_3] : memref<64x64xbf16, #tpu.memory_space<vmem>>, vector<64x64xbf16>
    %c0_4 = arith.constant 0 : index
    %c0_5 = arith.constant 0 : index
    %5 = vector.load %arg3[%c0_4, %c0_5] : memref<64x16xbf16, #tpu.memory_space<vmem>>, vector<64x16xbf16>
    %cst = arith.constant dense<0.000000e+00> : vector<64x16xf32>
    %6 = tpu.matmul %4, %5, %cst {dimension_numbers = #tpu.dot_dimension_numbers<[1], [0], [0], [1], [0, 0, 1, 1], [], []>} : vector<64x64xbf16>, vector<64x16xbf16>, vector<64x16xf32> -> vector<64x16xf32>
    %7 = arith.addf %3, %6 : vector<64x16xf32>
    %c0_6 = arith.constant 0 : index
    %c0_7 = arith.constant 0 : index
    %8 = vector.load %arg9[%c0_6, %c0_7] : memref<64x16xf32, #tpu.memory_space<vmem>>, vector<64x16xf32>
    tpu.vector_store %arg9[%c0_6, %c0_7], %7 {strides = array<i32>} : memref<64x16xf32, #tpu.memory_space<vmem>>, vector<64x16xf32>,
    %c0_i32_8 = arith.constant 0 : i32
    %9 = arith.cmpi eq, %arg1, %c0_i32_8 : i32
    %10 = arith.extui %9 : i1 to i32
    %c0_i32_9 = arith.constant 0 : i32
    %11 = arith.cmpi ne, %10, %c0_i32_9 : i32
    scf.if %11 {
      %c0_10 = arith.constant 0 : index
      %c0_11 = arith.constant 0 : index
      %12 = vector.load %arg9[%c0_10, %c0_11] : memref<64x16xf32, #tpu.memory_space<vmem>>, vector<64x16xf32>
      %cst_12 = arith.constant 0.000000e+00 : f32
      %13 = vector.broadcast %cst_12 : f32 to vector<64x16xf32>
      %14 = arith.cmpf oge, %12, %13 : vector<64x16xf32>
      %cst_13 = arith.constant 0.00999999977 : f32
      %15 = vector.broadcast %cst_13 : f32 to vector<64x16xf32>
      %16 = arith.mulf %15, %12 : vector<64x16xf32>
      %17 = arith.select %14, %12, %16 : vector<64x16xi1>, vector<64x16xf32>
      %c0_14 = arith.constant 0 : index
      %c0_15 = arith.constant 0 : index
      %18 = vector.load %arg4[%c0_14, %c0_15] : memref<64x16xbf16, #tpu.memory_space<vmem>>, vector<64x16xbf16>
      %19 = arith.extf %18 : vector<64x16xbf16> to vector<64x16xf32>
      %c0_16 = arith.constant 0 : index
      %c0_17 = arith.constant 0 : index
      %20 = vector.load %arg5[%c0_16, %c0_17] : memref<16x32xf32, #tpu.memory_space<vmem>>, vector<16x32xf32>
      %cst_18 = arith.constant dense<0.000000e+00> : vector<64x32xf32>
      %21 = tpu.matmul %19, %20, %cst_18 {dimension_numbers = #tpu.dot_dimension_numbers<[1], [0], [0], [1], [0, 0, 1, 1], [], []>} : vector<64x16xf32>, vector<16x32xf32>, vector<64x32xf32> -> vector<64x32xf32>
      %c0_19 = arith.constant 0 : index
      %c0_20 = arith.constant 0 : index
      %22 = vector.load %arg6[%c0_19, %c0_20] : memref<16x32xf32, #tpu.memory_space<vmem>>, vector<16x32xf32>
      %cst_21 = arith.constant dense<0.000000e+00> : vector<64x32xf32>
      %23 = tpu.matmul %17, %22, %cst_21 {dimension_numbers = #tpu.dot_dimension_numbers<[1], [0], [0], [1], [0, 0, 1, 1], [], []>} : vector<64x16xf32>, vector<16x32xf32>, vector<64x32xf32> -> vector<64x32xf32>
      %24 = arith.addf %21, %23 : vector<64x32xf32>
      %c0_22 = arith.constant 0 : index
      %c0_23 = arith.constant 0 : index
      %25 = vector.load %arg7[%c0_22, %c0_23] : memref<1x32xf32, #tpu.memory_space<vmem>>, vector<1x32xf32>
      %26 = vector.broadcast %25 : vector<1x32xf32> to vector<64x32xf32>
      %27 = arith.addf %24, %26 : vector<64x32xf32>
      %cst_24 = arith.constant 0.000000e+00 : f32
      %28 = vector.broadcast %cst_24 : f32 to vector<64x32xf32>
      %29 = arith.maximumf %27, %28 : vector<64x32xf32>
      %30 = arith.truncf %29 : vector<64x32xf32> to vector<64x32xbf16>
      %c0_25 = arith.constant 0 : index
      %c0_26 = arith.constant 0 : index
      %31 = vector.load %arg8[%c0_25, %c0_26] : memref<64x32xbf16, #tpu.memory_space<vmem>>, vector<64x32xbf16>
      tpu.vector_store %arg8[%c0_25, %c0_26], %30 {strides = array<i32>} : memref<64x32xbf16, #tpu.memory_space<vmem>>, vector<64x32xbf16>,
    } else {
    }
    return
  }
  func.func @transform_0(%arg0: i32, %arg1: i32) -> (i32, i32) {
    %c0_i32 = arith.constant 0 : i32
    return %arg0, %arg1 : i32, i32
  }
  func.func @transform_1(%arg0: i32, %arg1: i32) -> (i32, i32) {
    %c0_i32 = arith.constant 0 : i32
    %c0_i32_0 = arith.constant 0 : i32
    return %arg1, %c0_i32 : i32, i32
  }
  func.func @transform_2(%arg0: i32, %arg1: i32) -> (i32, i32) {
    %c0_i32 = arith.constant 0 : i32
    %c0_i32_0 = arith.constant 0 : i32
    return %arg0, %c0_i32 : i32, i32
  }
  func.func @transform_3(%arg0: i32, %arg1: i32) -> (i32, i32) {
    %c0_i32 = arith.constant 0 : i32
    %c0_i32_0 = arith.constant 0 : i32
    %c0_i32_1 = arith.constant 0 : i32
    return %c0_i32, %c0_i32_0 : i32, i32
  }
  func.func @transform_4(%arg0: i32, %arg1: i32) -> (i32, i32) {
    %c0_i32 = arith.constant 0 : i32
    %c0_i32_0 = arith.constant 0 : i32
    %c0_i32_1 = arith.constant 0 : i32
    return %c0_i32, %c0_i32_0 : i32, i32
  }
  func.func @transform_5(%arg0: i32, %arg1: i32) -> (i32, i32) {
    %c0_i32 = arith.constant 0 : i32
    %c0_i32_0 = arith.constant 0 : i32
    %c0_i32_1 = arith.constant 0 : i32
    return %c0_i32, %c0_i32_0 : i32, i32
  }
  func.func @transform_6(%arg0: i32, %arg1: i32) -> (i32, i32) {
    %c0_i32 = arith.constant 0 : i32
    %c0_i32_0 = arith.constant 0 : i32
    return %arg0, %c0_i32 : i32, i32
  }
}

module attributes {stable_mosaic.version = 11 : i64} {
  func.func @_sage_conv_mlp_kernel(%arg0: i32, %arg1: i32, %arg2: memref<64x64xbf16, #tpu.memory_space<vmem>>, %arg3: memref<64x32xbf16, #tpu.memory_space<vmem>>, %arg4: memref<64x32xbf16, #tpu.memory_space<vmem>>, %arg5: memref<32x32xf32, #tpu.memory_space<vmem>>, %arg6: memref<32x32xf32, #tpu.memory_space<vmem>>, %arg7: memref<1x32xf32, #tpu.memory_space<vmem>>, %arg8: memref<64x32xf32, #tpu.memory_space<vmem>>, %arg9: memref<32x32xf32, #tpu.memory_space<vmem>>, %arg10: memref<1x32xf32, #tpu.memory_space<vmem>>, %arg11: memref<32x128xf32, #tpu.memory_space<vmem>>, %arg12: memref<1x128xf32, #tpu.memory_space<vmem>>, %arg13: memref<64x128xf32, #tpu.memory_space<vmem>>, %arg14: memref<64x32xf32, #tpu.memory_space<vmem>>) attributes {dimension_semantics = [#tpu.dimension_semantics<parallel>, #tpu.dimension_semantics<arbitrary>], iteration_bounds = array<i64: 1, 1>, scalar_prefetch = 0 : i64, scratch_operands = 1 : i64, tpu.core_type = #tpu.core_type<tc>, window_params = [{transform_indices = @transform_0, window_bounds = array<i64: 64, 64>}, {transform_indices = @transform_1, window_bounds = array<i64: 64, 32>}, {transform_indices = @transform_2, window_bounds = array<i64: 64, 32>}, {pipeline_mode = #tpu.pipeline_mode<synchronous>, transform_indices = @transform_3, window_bounds = array<i64: 32, 32>}, {pipeline_mode = #tpu.pipeline_mode<synchronous>, transform_indices = @transform_4, window_bounds = array<i64: 32, 32>}, {pipeline_mode = #tpu.pipeline_mode<synchronous>, transform_indices = @transform_5, window_bounds = array<i64: 1, 32>}, {transform_indices = @transform_6, window_bounds = array<i64: 64, 32>}, {pipeline_mode = #tpu.pipeline_mode<synchronous>, transform_indices = @transform_7, window_bounds = array<i64: 32, 32>}, {pipeline_mode = #tpu.pipeline_mode<synchronous>, transform_indices = @transform_8, window_bounds = array<i64: 1, 32>}, {pipeline_mode = #tpu.pipeline_mode<synchronous>, transform_indices = @transform_9, window_bounds = array<i64: 32, 128>}, {pipeline_mode = #tpu.pipeline_mode<synchronous>, transform_indices = @transform_10, window_bounds = array<i64: 1, 128>}, {transform_indices = @transform_11, window_bounds = array<i64: 64, 128>}]} {
    %c0_i32 = arith.constant 0 : i32
    %0 = arith.cmpi eq, %arg1, %c0_i32 : i32
    %1 = arith.extui %0 : i1 to i32
    %c0_i32_0 = arith.constant 0 : i32
    %2 = arith.cmpi ne, %1, %c0_i32_0 : i32
    scf.if %2 {
      %cst_10 = arith.constant 0.000000e+00 : f32
      %12 = vector.broadcast %cst_10 : f32 to vector<64x32xf32>
      %c0_11 = arith.constant 0 : index
      %c0_12 = arith.constant 0 : index
      %13 = vector.load %arg14[%c0_11, %c0_12] : memref<64x32xf32, #tpu.memory_space<vmem>>, vector<64x32xf32>
      tpu.vector_store %arg14[%c0_11, %c0_12], %12 {strides = array<i32>} : memref<64x32xf32, #tpu.memory_space<vmem>>, vector<64x32xf32>,
    } else {
    }
    %c0 = arith.constant 0 : index
    %c0_1 = arith.constant 0 : index
    %3 = vector.load %arg14[%c0, %c0_1] : memref<64x32xf32, #tpu.memory_space<vmem>>, vector<64x32xf32>
    %c0_2 = arith.constant 0 : index
    %c0_3 = arith.constant 0 : index
    %4 = vector.load %arg2[%c0_2, %c0_3] : memref<64x64xbf16, #tpu.memory_space<vmem>>, vector<64x64xbf16>
    %c0_4 = arith.constant 0 : index
    %c0_5 = arith.constant 0 : index
    %5 = vector.load %arg3[%c0_4, %c0_5] : memref<64x32xbf16, #tpu.memory_space<vmem>>, vector<64x32xbf16>
    %cst = arith.constant dense<0.000000e+00> : vector<64x32xf32>
    %6 = tpu.matmul %4, %5, %cst {dimension_numbers = #tpu.dot_dimension_numbers<[1], [0], [0], [1], [0, 0, 1, 1], [], []>} : vector<64x64xbf16>, vector<64x32xbf16>, vector<64x32xf32> -> vector<64x32xf32>
    %7 = arith.addf %3, %6 : vector<64x32xf32>
    %c0_6 = arith.constant 0 : index
    %c0_7 = arith.constant 0 : index
    %8 = vector.load %arg14[%c0_6, %c0_7] : memref<64x32xf32, #tpu.memory_space<vmem>>, vector<64x32xf32>
    tpu.vector_store %arg14[%c0_6, %c0_7], %7 {strides = array<i32>} : memref<64x32xf32, #tpu.memory_space<vmem>>, vector<64x32xf32>,
    %c0_i32_8 = arith.constant 0 : i32
    %9 = arith.cmpi eq, %arg1, %c0_i32_8 : i32
    %10 = arith.extui %9 : i1 to i32
    %c0_i32_9 = arith.constant 0 : i32
    %11 = arith.cmpi ne, %10, %c0_i32_9 : i32
    scf.if %11 {
      %c0_10 = arith.constant 0 : index
      %c0_11 = arith.constant 0 : index
      %12 = vector.load %arg14[%c0_10, %c0_11] : memref<64x32xf32, #tpu.memory_space<vmem>>, vector<64x32xf32>
      %cst_12 = arith.constant 0.000000e+00 : f32
      %13 = vector.broadcast %cst_12 : f32 to vector<64x32xf32>
      %14 = arith.cmpf oge, %12, %13 : vector<64x32xf32>
      %cst_13 = arith.constant 0.00999999977 : f32
      %15 = vector.broadcast %cst_13 : f32 to vector<64x32xf32>
      %16 = arith.mulf %15, %12 : vector<64x32xf32>
      %17 = arith.select %14, %12, %16 : vector<64x32xi1>, vector<64x32xf32>
      %c0_14 = arith.constant 0 : index
      %c0_15 = arith.constant 0 : index
      %18 = vector.load %arg4[%c0_14, %c0_15] : memref<64x32xbf16, #tpu.memory_space<vmem>>, vector<64x32xbf16>
      %19 = arith.extf %18 : vector<64x32xbf16> to vector<64x32xf32>
      %c0_16 = arith.constant 0 : index
      %c0_17 = arith.constant 0 : index
      %20 = vector.load %arg5[%c0_16, %c0_17] : memref<32x32xf32, #tpu.memory_space<vmem>>, vector<32x32xf32>
      %cst_18 = arith.constant dense<0.000000e+00> : vector<64x32xf32>
      %21 = tpu.matmul %19, %20, %cst_18 {dimension_numbers = #tpu.dot_dimension_numbers<[1], [0], [0], [1], [0, 0, 1, 1], [], []>} : vector<64x32xf32>, vector<32x32xf32>, vector<64x32xf32> -> vector<64x32xf32>
      %c0_19 = arith.constant 0 : index
      %c0_20 = arith.constant 0 : index
      %22 = vector.load %arg6[%c0_19, %c0_20] : memref<32x32xf32, #tpu.memory_space<vmem>>, vector<32x32xf32>
      %cst_21 = arith.constant dense<0.000000e+00> : vector<64x32xf32>
      %23 = tpu.matmul %17, %22, %cst_21 {dimension_numbers = #tpu.dot_dimension_numbers<[1], [0], [0], [1], [0, 0, 1, 1], [], []>} : vector<64x32xf32>, vector<32x32xf32>, vector<64x32xf32> -> vector<64x32xf32>
      %24 = arith.addf %21, %23 : vector<64x32xf32>
      %c0_22 = arith.constant 0 : index
      %c0_23 = arith.constant 0 : index
      %25 = vector.load %arg7[%c0_22, %c0_23] : memref<1x32xf32, #tpu.memory_space<vmem>>, vector<1x32xf32>
      %26 = vector.broadcast %25 : vector<1x32xf32> to vector<64x32xf32>
      %27 = arith.addf %24, %26 : vector<64x32xf32>
      %cst_24 = arith.constant 0.000000e+00 : f32
      %28 = vector.broadcast %cst_24 : f32 to vector<64x32xf32>
      %29 = arith.maximumf %27, %28 : vector<64x32xf32>
      %c0_25 = arith.constant 0 : index
      %c0_26 = arith.constant 0 : index
      %30 = vector.load %arg8[%c0_25, %c0_26] : memref<64x32xf32, #tpu.memory_space<vmem>>, vector<64x32xf32>
      %31 = arith.mulf %29, %30 : vector<64x32xf32>
      %c0_27 = arith.constant 0 : index
      %c0_28 = arith.constant 0 : index
      %32 = vector.load %arg9[%c0_27, %c0_28] : memref<32x32xf32, #tpu.memory_space<vmem>>, vector<32x32xf32>
      %cst_29 = arith.constant dense<0.000000e+00> : vector<64x32xf32>
      %33 = tpu.matmul %31, %32, %cst_29 {dimension_numbers = #tpu.dot_dimension_numbers<[1], [0], [0], [1], [0, 0, 1, 1], [], []>} : vector<64x32xf32>, vector<32x32xf32>, vector<64x32xf32> -> vector<64x32xf32>
      %c0_30 = arith.constant 0 : index
      %c0_31 = arith.constant 0 : index
      %34 = vector.load %arg10[%c0_30, %c0_31] : memref<1x32xf32, #tpu.memory_space<vmem>>, vector<1x32xf32>
      %35 = vector.broadcast %34 : vector<1x32xf32> to vector<64x32xf32>
      %36 = arith.addf %33, %35 : vector<64x32xf32>
      %cst_32 = arith.constant 0.000000e+00 : f32
      %37 = vector.broadcast %cst_32 : f32 to vector<64x32xf32>
      %38 = arith.maximumf %36, %37 : vector<64x32xf32>
      %c0_33 = arith.constant 0 : index
      %c0_34 = arith.constant 0 : index
      %39 = vector.load %arg11[%c0_33, %c0_34] : memref<32x128xf32, #tpu.memory_space<vmem>>, vector<32x128xf32>
      %cst_35 = arith.constant dense<0.000000e+00> : vector<64x128xf32>
      %40 = tpu.matmul %38, %39, %cst_35 {dimension_numbers = #tpu.dot_dimension_numbers<[1], [0], [0], [1], [0, 0, 1, 1], [], []>} : vector<64x32xf32>, vector<32x128xf32>, vector<64x128xf32> -> vector<64x128xf32>
      %c0_36 = arith.constant 0 : index
      %c0_37 = arith.constant 0 : index
      %41 = vector.load %arg12[%c0_36, %c0_37] : memref<1x128xf32, #tpu.memory_space<vmem>>, vector<1x128xf32>
      %42 = vector.broadcast %41 : vector<1x128xf32> to vector<64x128xf32>
      %43 = arith.addf %40, %42 : vector<64x128xf32>
      %c0_38 = arith.constant 0 : index
      %c0_39 = arith.constant 0 : index
      %44 = vector.load %arg13[%c0_38, %c0_39] : memref<64x128xf32, #tpu.memory_space<vmem>>, vector<64x128xf32>
      tpu.vector_store %arg13[%c0_38, %c0_39], %43 {strides = array<i32>} : memref<64x128xf32, #tpu.memory_space<vmem>>, vector<64x128xf32>,
    } else {
    }
    return
  }
  func.func @transform_0(%arg0: i32, %arg1: i32) -> (i32, i32) {
    %c0_i32 = arith.constant 0 : i32
    return %arg0, %arg1 : i32, i32
  }
  func.func @transform_1(%arg0: i32, %arg1: i32) -> (i32, i32) {
    %c0_i32 = arith.constant 0 : i32
    %c0_i32_0 = arith.constant 0 : i32
    return %arg1, %c0_i32 : i32, i32
  }
  func.func @transform_2(%arg0: i32, %arg1: i32) -> (i32, i32) {
    %c0_i32 = arith.constant 0 : i32
    %c0_i32_0 = arith.constant 0 : i32
    return %arg0, %c0_i32 : i32, i32
  }
  func.func @transform_3(%arg0: i32, %arg1: i32) -> (i32, i32) {
    %c0_i32 = arith.constant 0 : i32
    %c0_i32_0 = arith.constant 0 : i32
    %c0_i32_1 = arith.constant 0 : i32
    return %c0_i32, %c0_i32_0 : i32, i32
  }
  func.func @transform_4(%arg0: i32, %arg1: i32) -> (i32, i32) {
    %c0_i32 = arith.constant 0 : i32
    %c0_i32_0 = arith.constant 0 : i32
    %c0_i32_1 = arith.constant 0 : i32
    return %c0_i32, %c0_i32_0 : i32, i32
  }
  func.func @transform_5(%arg0: i32, %arg1: i32) -> (i32, i32) {
    %c0_i32 = arith.constant 0 : i32
    %c0_i32_0 = arith.constant 0 : i32
    %c0_i32_1 = arith.constant 0 : i32
    return %c0_i32, %c0_i32_0 : i32, i32
  }
  func.func @transform_6(%arg0: i32, %arg1: i32) -> (i32, i32) {
    %c0_i32 = arith.constant 0 : i32
    %c0_i32_0 = arith.constant 0 : i32
    return %arg0, %c0_i32 : i32, i32
  }
  func.func @transform_7(%arg0: i32, %arg1: i32) -> (i32, i32) {
    %c0_i32 = arith.constant 0 : i32
    %c0_i32_0 = arith.constant 0 : i32
    %c0_i32_1 = arith.constant 0 : i32
    return %c0_i32, %c0_i32_0 : i32, i32
  }
  func.func @transform_8(%arg0: i32, %arg1: i32) -> (i32, i32) {
    %c0_i32 = arith.constant 0 : i32
    %c0_i32_0 = arith.constant 0 : i32
    %c0_i32_1 = arith.constant 0 : i32
    return %c0_i32, %c0_i32_0 : i32, i32
  }
  func.func @transform_9(%arg0: i32, %arg1: i32) -> (i32, i32) {
    %c0_i32 = arith.constant 0 : i32
    %c0_i32_0 = arith.constant 0 : i32
    %c0_i32_1 = arith.constant 0 : i32
    return %c0_i32, %c0_i32_0 : i32, i32
  }
  func.func @transform_10(%arg0: i32, %arg1: i32) -> (i32, i32) {
    %c0_i32 = arith.constant 0 : i32
    %c0_i32_0 = arith.constant 0 : i32
    %c0_i32_1 = arith.constant 0 : i32
    return %c0_i32, %c0_i32_0 : i32, i32
  }
  func.func @transform_11(%arg0: i32, %arg1: i32) -> (i32, i32) {
    %c0_i32 = arith.constant 0 : i32
    %c0_i32_0 = arith.constant 0 : i32
    return %arg0, %c0_i32 : i32, i32
  }
}

</mosaic_0001>

<llo_original>
// kernel: gcn_classification_weighted_forward.2
$region0: #{gcn_classification_weighted_forward.2}
  #allocation0 [shape = 'u32[]', space=smem, size = 0x4, offset = 0x4, fixed_abs, tag = 'smem constant byte address 0x4 - core index']
  #allocation1 [shape = 'u32[144,128]{1,0:T(1,128)}', space=vmem, size = 0x12000, scoped, tag = 'internal scratch']
  #allocation2 [shape = 'f32[64,16]{1,0:T(8,128)}', space=vmem, size = 0x8000, scoped, tag = 'scratch operand']
  %s0 = inlined_call_operand.vmem [shape: bf16[64,64], index: 0, kind: input, shape index: {}]
  %s1 = inlined_call_operand.vmem [shape: bf16[64,16], index: 1, kind: input, shape index: {}, may-alias: {1,2}]
  %s2 = inlined_call_operand.vmem [shape: bf16[64,16], index: 2, kind: input, shape index: {}, may-alias: {1,2}]
  %s3 = inlined_call_operand.vmem [shape: f32[16,32], index: 3, kind: input, shape index: {}]
  %s4 = inlined_call_operand.vmem [shape: f32[16,32], index: 4, kind: input, shape index: {}]
  %s5 = inlined_call_operand.vmem [shape: f32[1,32], index: 5, kind: input, shape index: {}]
  %s6 = inlined_call_operand.vmem [shape: bf16[64,32], index: 6, kind: output, shape index: {}]
  %s7 = sld [smem:[#allocation0]]
  $region42: #{gcn_classification_weighted_forward.2} parent=0
    _
  %s9 = ssub.s32 1, %s7
  %s10 = scalar_select 0, %s9, %s7
  // Predicated region
  $region2: #{gcn_classification_weighted_forward.2} parent=0 // pred_check
    _
  $region3: #{gcn_classification_weighted_forward.2} parent=0 // pred_check_branch
    %12 = sbr.rel (0) target = $region5
  $region4: #{gcn_classification_weighted_forward.2} parent=0 // pred_region
    _
  $region5: #{gcn_classification_weighted_forward.2} parent=0 // pred_fallthru
    _
  // Predicated region
  $region6: #{gcn_classification_weighted_forward.2} parent=0 // pred_check
    _
  $region7: #{gcn_classification_weighted_forward.2} parent=0 // pred_check_branch
    %14 = sbr.rel (0) target = $region9
  $region8: #{gcn_classification_weighted_forward.2} parent=0 // pred_region
    _
  $region9: #{gcn_classification_weighted_forward.2} parent=0 // pred_fallthru
    _
  // Predicated region
  $region10: #{gcn_classification_weighted_forward.2} parent=0 // pred_check
    _
  $region11: #{gcn_classification_weighted_forward.2} parent=0 // pred_check_branch
    %16 = sbr.rel (0) target = $region13
  $region12: #{gcn_classification_weighted_forward.2} parent=0 // pred_region
    _
  $region13: #{gcn_classification_weighted_forward.2} parent=0 // pred_fallthru
    _
  // Predicated region
  $region14: #{gcn_classification_weighted_forward.2} parent=0 // pred_check
    _
  $region15: #{gcn_classification_weighted_forward.2} parent=0 // pred_check_branch
    %18 = sbr.rel (0) target = $region17
  $region16: #{gcn_classification_weighted_forward.2} parent=0 // pred_region
    _
  $region17: #{gcn_classification_weighted_forward.2} parent=0 // pred_fallthru
    _
  // Predicated region
  $region18: #{gcn_classification_weighted_forward.2} parent=0 // pred_check
    _
  $region19: #{gcn_classification_weighted_forward.2} parent=0 // pred_check_branch
    %20 = sbr.rel (0) target = $region21
  $region20: #{gcn_classification_weighted_forward.2} parent=0 // pred_region
    _
  $region21: #{gcn_classification_weighted_forward.2} parent=0 // pred_fallthru
    _
  // Predicated region
  $region22: #{gcn_classification_weighted_forward.2} parent=0 // pred_check
    _
  $region23: #{gcn_classification_weighted_forward.2} parent=0 // pred_check_branch
    %22 = sbr.rel (0) target = $region25
  $region24: #{gcn_classification_weighted_forward.2} parent=0 // pred_region
    _
  $region25: #{gcn_classification_weighted_forward.2} parent=0 // pred_fallthru
    _
  %p24 = scmp.eq.s32.totalorder 0, 0
  // Predicated region
  $region26: #{gcn_classification_weighted_forward.2} parent=0 // pred_check
    %p25 = pneg %p24
  $region27: #{gcn_classification_weighted_forward.2} parent=0 // pred_check_branch
    %27 = sbr.rel (%p25) target = $region29
  $region28: #{gcn_classification_weighted_forward.2} parent=0 // pred_region
    %vm28 = vcmask 130048
    %29 = vst.msk [vmem:[#allocation2] sm:$0xff] %vm28, 0.0
    %30 = vst.msk [vmem:[#allocation2 + $0x8] sm:$0xff] %vm28, 0.0
    %31 = vst.msk [vmem:[#allocation2 + $0x10] sm:$0xff] %vm28, 0.0
    %32 = vst.msk [vmem:[#allocation2 + $0x18] sm:$0xff] %vm28, 0.0
    %33 = vst.msk [vmem:[#allocation2 + $0x20] sm:$0xff] %vm28, 0.0
    %34 = vst.msk [vmem:[#allocation2 + $0x28] sm:$0xff] %vm28, 0.0
    %35 = vst.msk [vmem:[#allocation2 + $0x30] sm:$0xff] %vm28, 0.0
    %36 = vst.msk [vmem:[#allocation2 + $0x38] sm:$0xff] %vm28, 0.0
  $region29: #{gcn_classification_weighted_forward.2} parent=0 // pred_fallthru
    _
  %v37 = vld [vmem:[#allocation2] sm:$0xff]
  %v38 = vld [vmem:[#allocation2 + $0x8] sm:$0xff]
  %v39 = vld [vmem:[#allocation2 + $0x10] sm:$0xff]
  %v40 = vld [vmem:[#allocation2 + $0x18] sm:$0xff]
  %v41 = vld [vmem:[#allocation2 + $0x20] sm:$0xff]
  %v42 = vld [vmem:[#allocation2 + $0x28] sm:$0xff]
  %v43 = vld [vmem:[#allocation2 + $0x30] sm:$0xff]
  %v44 = vld [vmem:[#allocation2 + $0x38] sm:$0xff]
  %v45 = vld [vmem:[%s0] sm:$0xf]
  %v46 = vld [vmem:[%s0 + $0x4] sm:$0xf]
  %v47 = vld [vmem:[%s0 + $0x8] sm:$0xf]
  %v48 = vld [vmem:[%s0 + $0xc] sm:$0xf]
  %v49 = vld [vmem:[%s0 + $0x10] sm:$0xf]
  %v50 = vld [vmem:[%s0 + $0x14] sm:$0xf]
  %v51 = vld [vmem:[%s0 + $0x18] sm:$0xf]
  %v52 = vld [vmem:[%s0 + $0x1c] sm:$0xf]
  %v53 = vld [vmem:[%s1] sm:$0xf]
  %v54 = vld [vmem:[%s1 + $0x4] sm:$0xf]
  %v55 = vld [vmem:[%s1 + $0x8] sm:$0xf]
  %v56 = vld [vmem:[%s1 + $0xc] sm:$0xf]
  %v57 = vld [vmem:[%s1 + $0x10] sm:$0xf]
  %v58 = vld [vmem:[%s1 + $0x14] sm:$0xf]
  %v59 = vld [vmem:[%s1 + $0x18] sm:$0xf]
  %v60 = vld [vmem:[%s1 + $0x1c] sm:$0xf]
  %v69 = vunpack.c.l.b16 %v45
  %v70 = vunpack.c.l.b16 %v46
  %v71 = vunpack.c.l.b16 %v47
  %v72 = vunpack.c.l.b16 %v48
  %v73 = vunpack.c.l.b16 %v49
  %v74 = vunpack.c.l.b16 %v50
  %v75 = vunpack.c.l.b16 %v51
  %v76 = vunpack.c.l.b16 %v52
  %v77 = vpack.c.b16 %v70, %v69
  %v78 = vpack.c.b16 %v72, %v71
  %v79 = vpack.c.b16 %v74, %v73
  %v80 = vpack.c.b16 %v76, %v75
  %v89 = vunpack.c.l.b16 %v53
  %v90 = vunpack.c.l.b16 %v54
  %v91 = vunpack.c.l.b16 %v55
  %v92 = vunpack.c.l.b16 %v56
  %v93 = vunpack.c.l.b16 %v57
  %v94 = vunpack.c.l.b16 %v58
  %v95 = vunpack.c.l.b16 %v59
  %v96 = vunpack.c.l.b16 %v60
  %v97 = vpack.c.b16 %v90, %v89
  %v98 = vpack.c.b16 %v92, %v91
  %v99 = vpack.c.b16 %v94, %v93
  %v100 = vpack.c.b16 %v96, %v95
  %vm105 = vcmask 523264
  %v107 = vsel %vm105, %v77, 0
  %v110 = vsel %vm105, %v78, 0
  %v113 = vsel %vm105, %v79, 0
  %v116 = vsel %vm105, %v80, 0
  %118 = vmatprep.subr.bf16.mxu0 0
  %119 = vmatpush1.bf16.msra.mxu0 0
  %120 = vmatprep.subr.bf16.mxu0 0
  %121 = vmatpush1.bf16.msra.mxu0 0
  %122 = vmatprep.subr.bf16.mxu0 0
  %123 = vmatpush1.bf16.msra.mxu0 0
  %124 = vmatprep.subr.bf16.mxu0 0
  %125 = vmatpush1.bf16.msra.mxu0 0
  %126 = vmatprep.subr.bf16.mxu0 0
  %127 = vmatpush1.bf16.msra.mxu0 %v100
  %128 = vmatprep.subr.bf16.mxu0 0
  %129 = vmatpush1.bf16.msra.mxu0 %v99
  %130 = vmatprep.subr.bf16.mxu0 0
  %131 = vmatpush1.bf16.msra.mxu0 %v98
  %132 = vmatprep.subr.bf16.mxu0 0
  %133 = vmatpush1.bf16.msra.mxu0 %v97
  %134 = vmatprep.subr.bf16.mxu0 0
  %135 = vmatpush2.bf16.msra.mxu0 0
  %136 = vmatprep.subr.bf16.mxu0 0
  %137 = vmatpush2.bf16.msra.mxu0 0
  %138 = vmatprep.subr.bf16.mxu0 0
  %139 = vmatpush2.bf16.msra.mxu0 0
  %140 = vmatprep.subr.bf16.mxu0 0
  %141 = vmatpush2.bf16.msra.mxu0 0
  %142 = vmatprep.subr.bf16.mxu0 0
  %143 = vmatpush2.bf16.msra.mxu0 0
  %144 = vmatprep.subr.bf16.mxu0 0
  %145 = vmatpush2.bf16.msra.mxu0 0
  %146 = vmatprep.subr.bf16.mxu0 0
  %147 = vmatpush2.bf16.msra.mxu0 0
  %148 = vmatprep.subr.bf16.mxu0 0
  %149 = vmatpush2.bf16.msra.mxu0 0
  %150 = vmatprep.mubr.bf16.mxu0 0
  %151 = vmatmul.mubr.bf16.gmra.mxu0 %v107
  %v152 = vpop.f32.mrf.mxu0
  %v153 = vadd.f32 0.0, %v152
  %v154 = vpop.f32.mrf.mxu0
  %v155 = vpop.f32.mrf.mxu0
  %v156 = vadd.f32 0.0, %v155
  %v157 = vpop.f32.mrf.mxu0
  %158 = vmatprep.mubr.bf16.mxu0 0
  %159 = vmatmul.mubr.bf16.gmra.mxu0 %v110
  %v160 = vpop.f32.mrf.mxu0
  %v161 = vadd.f32 0.0, %v160
  %v162 = vpop.f32.mrf.mxu0
  %v163 = vpop.f32.mrf.mxu0
  %v164 = vadd.f32 0.0, %v163
  %v165 = vpop.f32.mrf.mxu0
  %166 = vmatprep.mubr.bf16.mxu0 0
  %167 = vmatmul.mubr.bf16.gmra.mxu0 %v113
  %v168 = vpop.f32.mrf.mxu0
  %v169 = vadd.f32 0.0, %v168
  %v170 = vpop.f32.mrf.mxu0
  %v171 = vpop.f32.mrf.mxu0
  %v172 = vadd.f32 0.0, %v171
  %v173 = vpop.f32.mrf.mxu0
  %174 = vmatprep.mubr.bf16.mxu0 0
  %175 = vmatmul.mubr.bf16.gmra.mxu0 %v116
  %v176 = vpop.f32.mrf.mxu0
  %v177 = vadd.f32 0.0, %v176
  %v178 = vpop.f32.mrf.mxu0
  %v179 = vpop.f32.mrf.mxu0
  %v180 = vadd.f32 0.0, %v179
  %v181 = vpop.f32.mrf.mxu0
  %182 = vdwg.mxu0
  %v183 = vadd.f32 %v37, %v153
  %v184 = vadd.f32 %v38, %v156
  %v185 = vadd.f32 %v39, %v161
  %v186 = vadd.f32 %v40, %v164
  %v187 = vadd.f32 %v41, %v169
  %v188 = vadd.f32 %v42, %v172
  %v189 = vadd.f32 %v43, %v177
  %v190 = vadd.f32 %v44, %v180
  %vm191 = vcmask 130048
  %192 = vst.msk [vmem:[#allocation2] sm:$0xff] %vm191, %v183
  %193 = vst.msk [vmem:[#allocation2 + $0x8] sm:$0xff] %vm191, %v184
  %194 = vst.msk [vmem:[#allocation2 + $0x10] sm:$0xff] %vm191, %v185
  %195 = vst.msk [vmem:[#allocation2 + $0x18] sm:$0xff] %vm191, %v186
  %196 = vst.msk [vmem:[#allocation2 + $0x20] sm:$0xff] %vm191, %v187
  %197 = vst.msk [vmem:[#allocation2 + $0x28] sm:$0xff] %vm191, %v188
  %198 = vst.msk [vmem:[#allocation2 + $0x30] sm:$0xff] %vm191, %v189
  %199 = vst.msk [vmem:[#allocation2 + $0x38] sm:$0xff] %vm191, %v190
  // Predicated region
  $region30: #{gcn_classification_weighted_forward.2} parent=0 // pred_check
    %p200 = pneg %p24
  $region31: #{gcn_classification_weighted_forward.2} parent=0 // pred_check_branch
    %202 = sbr.rel (%p200) target = $region33
  $region32: #{gcn_classification_weighted_forward.2} parent=0 // pred_region
    %v203 = vld [vmem:[#allocation2] sm:$0xff]
    %v204 = vld [vmem:[#allocation2 + $0x8] sm:$0xff]
    %v205 = vld [vmem:[#allocation2 + $0x10] sm:$0xff]
    %v206 = vld [vmem:[#allocation2 + $0x18] sm:$0xff]
    %v207 = vld [vmem:[#allocation2 + $0x20] sm:$0xff]
    %v208 = vld [vmem:[#allocation2 + $0x28] sm:$0xff]
    %v209 = vld [vmem:[#allocation2 + $0x30] sm:$0xff]
    %v210 = vld [vmem:[#allocation2 + $0x38] sm:$0xff]
    %vm211 = vcmp.ge.f32.partialorder %v203, 0.0
    %vm212 = vcmp.ge.f32.partialorder %v204, 0.0
    %vm213 = vcmp.ge.f32.partialorder %v205, 0.0
    %vm214 = vcmp.ge.f32.partialorder %v206, 0.0
    %vm215 = vcmp.ge.f32.partialorder %v207, 0.0
    %vm216 = vcmp.ge.f32.partialorder %v208, 0.0
    %vm217 = vcmp.ge.f32.partialorder %v209, 0.0
    %vm218 = vcmp.ge.f32.partialorder %v210, 0.0
    %v219 = vmul.f32 %v203, 0.01
    %v220 = vmul.f32 %v204, 0.01
    %v221 = vmul.f32 %v205, 0.01
    %v222 = vmul.f32 %v206, 0.01
    %v223 = vmul.f32 %v207, 0.01
    %v224 = vmul.f32 %v208, 0.01
    %v225 = vmul.f32 %v209, 0.01
    %v226 = vmul.f32 %v210, 0.01
    %v227 = vsel %vm211, %v203, %v219
    %v228 = vsel %vm212, %v204, %v220
    %v229 = vsel %vm213, %v205, %v221
    %v230 = vsel %vm214, %v206, %v222
    %v231 = vsel %vm215, %v207, %v223
    %v232 = vsel %vm216, %v208, %v224
    %v233 = vsel %vm217, %v209, %v225
    %v234 = vsel %vm218, %v210, %v226
    %v235 = vld [vmem:[%s2] sm:$0xf]
    %v236 = vld [vmem:[%s2 + $0x4] sm:$0xf]
    %v237 = vld [vmem:[%s2 + $0x8] sm:$0xf]
    %v238 = vld [vmem:[%s2 + $0xc] sm:$0xf]
    %v239 = vld [vmem:[%s2 + $0x10] sm:$0xf]
    %v240 = vld [vmem:[%s2 + $0x14] sm:$0xf]
    %v241 = vld [vmem:[%s2 + $0x18] sm:$0xf]
    %v242 = vld [vmem:[%s2 + $0x1c] sm:$0xf]
    %v243 = vunpack.c.l.bf16 %v235
    %v244 = vunpack.c.l.bf16 %v236
    %v245 = vunpack.c.l.bf16 %v237
    %v246 = vunpack.c.l.bf16 %v238
    %v247 = vunpack.c.l.bf16 %v239
    %v248 = vunpack.c.l.bf16 %v240
    %v249 = vunpack.c.l.bf16 %v241
    %v250 = vunpack.c.l.bf16 %v242
    %v251 = vld [vmem:[%s3] sm:$0xff]
    %v252 = vld [vmem:[%s3 + $0x8] sm:$0xff]
    %v253 = vld [vmem:[%s4] sm:$0xff]
    %v254 = vld [vmem:[%s4 + $0x8] sm:$0xff]
    %v256 = vsel %vm191, %v227, 0
    %v259 = vsel %vm191, %v228, 0
    %v262 = vsel %vm191, %v229, 0
    %v265 = vsel %vm191, %v230, 0
    %v268 = vsel %vm191, %v231, 0
    %v271 = vsel %vm191, %v232, 0
    %v274 = vsel %vm191, %v233, 0
    %v277 = vsel %vm191, %v234, 0
    %279 = vmatprep.subr.mxu0 0.0
    %280 = vmatpush1.msra.mxu0 0.0
    %281 = vmatprep.subr.mxu0 0.0
    %282 = vmatpush1.msra.mxu0 0.0
    %283 = vmatprep.subr.mxu0 0.0
    %284 = vmatpush1.msra.mxu0 0.0
    %285 = vmatprep.subr.mxu0 0.0
    %286 = vmatpush1.msra.mxu0 0.0
    %287 = vmatprep.subr.mxu0 0.0
    %288 = vmatpush1.msra.mxu0 0.0
    %289 = vmatprep.subr.mxu0 0.0
    %290 = vmatpush1.msra.mxu0 0.0
    %291 = vmatprep.subr.mxu0 0.0
    %292 = vmatpush1.msra.mxu0 0.0
    %293 = vmatprep.subr.mxu0 0.0
    %294 = vmatpush1.msra.mxu0 0.0
    %295 = vmatprep.subr.mxu0 0.0
    %296 = vmatpush1.msra.mxu0 0.0
    %297 = vmatprep.subr.mxu0 0.0
    %298 = vmatpush1.msra.mxu0 0.0
    %299 = vmatprep.subr.mxu0 0.0
    %300 = vmatpush1.msra.mxu0 0.0
    %301 = vmatprep.subr.mxu0 0.0
    %302 = vmatpush1.msra.mxu0 0.0
    %303 = vmatprep.subr.mxu0 0.0
    %304 = vmatpush1.msra.mxu0 0.0
    %305 = vmatprep.subr.mxu0 0.0
    %306 = vmatpush1.msra.mxu0 0.0
    %307 = vmatprep.subr.mxu0 0.0
    %308 = vmatpush1.msra.mxu0 %v254
    %309 = vmatprep.subr.mxu0 0.0
    %310 = vmatpush1.msra.mxu0 %v253
    %311 = vmatprep.subr.mxu0 0.0
    %312 = vmatpush2.msra.mxu0 0.0
    %313 = vmatprep.subr.mxu0 0.0
    %314 = vmatpush2.msra.mxu0 0.0
    %315 = vmatprep.subr.mxu0 0.0
    %316 = vmatpush2.msra.mxu0 0.0
    %317 = vmatprep.subr.mxu0 0.0
    %318 = vmatpush2.msra.mxu0 0.0
    %319 = vmatprep.subr.mxu0 0.0
    %320 = vmatpush2.msra.mxu0 0.0
    %321 = vmatprep.subr.mxu0 0.0
    %322 = vmatpush2.msra.mxu0 0.0
    %323 = vmatprep.subr.mxu0 0.0
    %324 = vmatpush2.msra.mxu0 0.0
    %325 = vmatprep.subr.mxu0 0.0
    %326 = vmatpush2.msra.mxu0 0.0
    %327 = vmatprep.subr.mxu0 0.0
    %328 = vmatpush2.msra.mxu0 0.0
    %329 = vmatprep.subr.mxu0 0.0
    %330 = vmatpush2.msra.mxu0 0.0
    %331 = vmatprep.subr.mxu0 0.0
    %332 = vmatpush2.msra.mxu0 0.0
    %333 = vmatprep.subr.mxu0 0.0
    %334 = vmatpush2.msra.mxu0 0.0
    %335 = vmatprep.subr.mxu0 0.0
    %336 = vmatpush2.msra.mxu0 0.0
    %337 = vmatprep.subr.mxu0 0.0
    %338 = vmatpush2.msra.mxu0 0.0
    %339 = vmatprep.subr.mxu0 0.0
    %340 = vmatpush2.msra.mxu0 0.0
    %341 = vmatprep.subr.mxu0 0.0
    %342 = vmatpush2.msra.mxu0 0.0
    %343 = vmatprep.mubr.f32.mxu0 0.0
    %344 = vmatmul.mubr.f32.gmra.mxu0 %v256
    %v345 = vpop.f32.mrf.mxu0
    %v346 = vadd.f32 0.0, %v345
    %v347 = vpop.f32.mrf.mxu0
    %348 = vmatprep.mubr.f32.mxu0 0.0
    %349 = vmatmul.mubr.f32.gmra.mxu0 %v259
    %v350 = vpop.f32.mrf.mxu0
    %v351 = vadd.f32 0.0, %v350
    %v352 = vpop.f32.mrf.mxu0
    %353 = vmatprep.mubr.f32.mxu0 0.0
    %354 = vmatmul.mubr.f32.gmra.mxu0 %v262
    %v355 = vpop.f32.mrf.mxu0
    %v356 = vadd.f32 0.0, %v355
    %v357 = vpop.f32.mrf.mxu0
    %358 = vmatprep.mubr.f32.mxu0 0.0
    %359 = vmatmul.mubr.f32.gmra.mxu0 %v265
    %v360 = vpop.f32.mrf.mxu0
    %v361 = vadd.f32 0.0, %v360
    %v362 = vpop.f32.mrf.mxu0
    %363 = vmatprep.mubr.f32.mxu0 0.0
    %364 = vmatmul.mubr.f32.gmra.mxu0 %v268
    %v365 = vpop.f32.mrf.mxu0
    %v366 = vadd.f32 0.0, %v365
    %v367 = vpop.f32.mrf.mxu0
    %368 = vmatprep.mubr.f32.mxu0 0.0
    %369 = vmatmul.mubr.f32.gmra.mxu0 %v271
    %v370 = vpop.f32.mrf.mxu0
    %v371 = vadd.f32 0.0, %v370
    %v372 = vpop.f32.mrf.mxu0
    %373 = vmatprep.mubr.f32.mxu0 0.0
    %374 = vmatmul.mubr.f32.gmra.mxu0 %v274
    %v375 = vpop.f32.mrf.mxu0
    %v376 = vadd.f32 0.0, %v375
    %v377 = vpop.f32.mrf.mxu0
    %378 = vmatprep.mubr.f32.mxu0 0.0
    %379 = vmatmul.mubr.f32.gmra.mxu0 %v277
    %v380 = vpop.f32.mrf.mxu0
    %v381 = vadd.f32 0.0, %v380
    %v382 = vpop.f32.mrf.mxu0
    %383 = vdwg.mxu0
    %v385 = vsel %vm191, %v243, 0
    %v388 = vsel %vm191, %v244, 0
    %v391 = vsel %vm191, %v245, 0
    %v394 = vsel %vm191, %v246, 0
    %v397 = vsel %vm191, %v247, 0
    %v400 = vsel %vm191, %v248, 0
    %v403 = vsel %vm191, %v249, 0
    %v406 = vsel %vm191, %v250, 0
    %408 = vmatprep.subr.mxu0 0.0
    %409 = vmatpush1.msra.mxu0 0.0
    %410 = vmatprep.subr.mxu0 0.0
    %411 = vmatpush1.msra.mxu0 0.0
    %412 = vmatprep.subr.mxu0 0.0
    %413 = vmatpush1.msra.mxu0 0.0
    %414 = vmatprep.subr.mxu0 0.0
    %415 = vmatpush1.msra.mxu0 0.0
    %416 = vmatprep.subr.mxu0 0.0
    %417 = vmatpush1.msra.mxu0 0.0
    %418 = vmatprep.subr.mxu0 0.0
    %419 = vmatpush1.msra.mxu0 0.0
    %420 = vmatprep.subr.mxu0 0.0
    %421 = vmatpush1.msra.mxu0 0.0
    %422 = vmatprep.subr.mxu0 0.0
    %423 = vmatpush1.msra.mxu0 0.0
    %424 = vmatprep.subr.mxu0 0.0
    %425 = vmatpush1.msra.mxu0 0.0
    %426 = vmatprep.subr.mxu0 0.0
    %427 = vmatpush1.msra.mxu0 0.0
    %428 = vmatprep.subr.mxu0 0.0
    %429 = vmatpush1.msra.mxu0 0.0
    %430 = vmatprep.subr.mxu0 0.0
    %431 = vmatpush1.msra.mxu0 0.0
    %432 = vmatprep.subr.mxu0 0.0
    %433 = vmatpush1.msra.mxu0 0.0
    %434 = vmatprep.subr.mxu0 0.0
    %435 = vmatpush1.msra.mxu0 0.0
    %436 = vmatprep.subr.mxu0 0.0
    %437 = vmatpush1.msra.mxu0 %v252
    %438 = vmatprep.subr.mxu0 0.0
    %439 = vmatpush1.msra.mxu0 %v251
    %440 = vmatprep.subr.mxu0 0.0
    %441 = vmatpush2.msra.mxu0 0.0
    %442 = vmatprep.subr.mxu0 0.0
    %443 = vmatpush2.msra.mxu0 0.0
    %444 = vmatprep.subr.mxu0 0.0
    %445 = vmatpush2.msra.mxu0 0.0
    %446 = vmatprep.subr.mxu0 0.0
    %447 = vmatpush2.msra.mxu0 0.0
    %448 = vmatprep.subr.mxu0 0.0
    %449 = vmatpush2.msra.mxu0 0.0
    %450 = vmatprep.subr.mxu0 0.0
    %451 = vmatpush2.msra.mxu0 0.0
    %452 = vmatprep.subr.mxu0 0.0
    %453 = vmatpush2.msra.mxu0 0.0
    %454 = vmatprep.subr.mxu0 0.0
    %455 = vmatpush2.msra.mxu0 0.0
    %456 = vmatprep.subr.mxu0 0.0
    %457 = vmatpush2.msra.mxu0 0.0
    %458 = vmatprep.subr.mxu0 0.0
    %459 = vmatpush2.msra.mxu0 0.0
    %460 = vmatprep.subr.mxu0 0.0
    %461 = vmatpush2.msra.mxu0 0.0
    %462 = vmatprep.subr.mxu0 0.0
    %463 = vmatpush2.msra.mxu0 0.0
    %464 = vmatprep.subr.mxu0 0.0
    %465 = vmatpush2.msra.mxu0 0.0
    %466 = vmatprep.subr.mxu0 0.0
    %467 = vmatpush2.msra.mxu0 0.0
    %468 = vmatprep.subr.mxu0 0.0
    %469 = vmatpush2.msra.mxu0 0.0
    %470 = vmatprep.subr.mxu0 0.0
    %471 = vmatpush2.msra.mxu0 0.0
    %472 = vmatprep.mubr.f32.mxu0 0.0
    %473 = vmatmul.mubr.f32.gmra.mxu0 %v385
    %v474 = vpop.f32.mrf.mxu0
    %v475 = vadd.f32 %v346, %v474
    %v476 = vpop.f32.mrf.mxu0
    %477 = vmatprep.mubr.f32.mxu0 0.0
    %478 = vmatmul.mubr.f32.gmra.mxu0 %v388
    %v479 = vpop.f32.mrf.mxu0
    %v480 = vadd.f32 %v351, %v479
    %v481 = vpop.f32.mrf.mxu0
    %482 = vmatprep.mubr.f32.mxu0 0.0
    %483 = vmatmul.mubr.f32.gmra.mxu0 %v391
    %v484 = vpop.f32.mrf.mxu0
    %v485 = vadd.f32 %v356, %v484
    %v486 = vpop.f32.mrf.mxu0
    %487 = vmatprep.mubr.f32.mxu0 0.0
    %488 = vmatmul.mubr.f32.gmra.mxu0 %v394
    %v489 = vpop.f32.mrf.mxu0
    %v490 = vadd.f32 %v361, %v489
    %v491 = vpop.f32.mrf.mxu0
    %492 = vmatprep.mubr.f32.mxu0 0.0
    %493 = vmatmul.mubr.f32.gmra.mxu0 %v397
    %v494 = vpop.f32.mrf.mxu0
    %v495 = vadd.f32 %v366, %v494
    %v496 = vpop.f32.mrf.mxu0
    %497 = vmatprep.mubr.f32.mxu0 0.0
    %498 = vmatmul.mubr.f32.gmra.mxu0 %v400
    %v499 = vpop.f32.mrf.mxu0
    %v500 = vadd.f32 %v371, %v499
    %v501 = vpop.f32.mrf.mxu0
    %502 = vmatprep.mubr.f32.mxu0 0.0
    %503 = vmatmul.mubr.f32.gmra.mxu0 %v403
    %v504 = vpop.f32.mrf.mxu0
    %v505 = vadd.f32 %v376, %v504
    %v506 = vpop.f32.mrf.mxu0
    %507 = vmatprep.mubr.f32.mxu0 0.0
    %508 = vmatmul.mubr.f32.gmra.mxu0 %v406
    %v509 = vpop.f32.mrf.mxu0
    %v510 = vadd.f32 %v381, %v509
    %v511 = vpop.f32.mrf.mxu0
    %512 = vdwg.mxu0
    %v513 = vld [vmem:[%s5] sm:$0x1]
    %v515 = vlaneseq
    %v516 = vshrl.u32 %v515, 7
    %v517 = vsub.s32 0, %v516
    %v518 = vrot.slane %v513, %v517
    %v520 = vadd.f32 %v475, %v518
    %v521 = vadd.f32 %v480, %v518
    %v522 = vadd.f32 %v485, %v518
    %v523 = vadd.f32 %v490, %v518
    %v524 = vadd.f32 %v495, %v518
    %v525 = vadd.f32 %v500, %v518
    %v526 = vadd.f32 %v505, %v518
    %v527 = vadd.f32 %v510, %v518
    %v528 = vmax.f32 %v520, 0.0
    %v529 = vmax.f32 %v521, 0.0
    %v530 = vmax.f32 %v522, 0.0
    %v531 = vmax.f32 %v523, 0.0
    %v532 = vmax.f32 %v524, 0.0
    %v533 = vmax.f32 %v525, 0.0
    %v534 = vmax.f32 %v526, 0.0
    %v535 = vmax.f32 %v527, 0.0
    %v536 = vpack.c.bf16 %v529, %v528
    %v537 = vpack.c.bf16 %v531, %v530
    %v538 = vpack.c.bf16 %v533, %v532
    %v539 = vpack.c.bf16 %v535, %v534
    %v544 = vunpack.c.l.b16 %v536
    %v545 = vunpack.c.h.b16 %v536
    %v546 = vunpack.c.l.b16 %v537
    %v547 = vunpack.c.h.b16 %v537
    %v548 = vunpack.c.l.b16 %v538
    %v549 = vunpack.c.h.b16 %v538
    %v550 = vunpack.c.l.b16 %v539
    %v551 = vunpack.c.h.b16 %v539
    %v552 = vpack.c.b16 %v544, %v544
    %v553 = vpack.c.b16 %v545, %v545
    %v554 = vpack.c.b16 %v546, %v546
    %v555 = vpack.c.b16 %v547, %v547
    %v556 = vpack.c.b16 %v548, %v548
    %v557 = vpack.c.b16 %v549, %v549
    %v558 = vpack.c.b16 %v550, %v550
    %v559 = vpack.c.b16 %v551, %v551
    %vm568 = vcmask 257024
    %569 = vst.msk [vmem:[%s6] sm:$0xf] %vm568, %v552
    %570 = vst.msk [vmem:[%s6 + $0x4] sm:$0xf] %vm568, %v553
    %571 = vst.msk [vmem:[%s6 + $0x8] sm:$0xf] %vm568, %v554
    %572 = vst.msk [vmem:[%s6 + $0xc] sm:$0xf] %vm568, %v555
    %573 = vst.msk [vmem:[%s6 + $0x10] sm:$0xf] %vm568, %v556
    %574 = vst.msk [vmem:[%s6 + $0x14] sm:$0xf] %vm568, %v557
    %575 = vst.msk [vmem:[%s6 + $0x18] sm:$0xf] %vm568, %v558
    %576 = vst.msk [vmem:[%s6 + $0x1c] sm:$0xf] %vm568, %v559
  $region33: #{gcn_classification_weighted_forward.2} parent=0 // pred_fallthru
    _
  // Predicated region
  $region34: #{gcn_classification_weighted_forward.2} parent=0 // pred_check
    _
  $region35: #{gcn_classification_weighted_forward.2} parent=0 // pred_check_branch
    %578 = sbr.rel (0) target = $region37
  $region36: #{gcn_classification_weighted_forward.2} parent=0 // pred_region
    _
  $region37: #{gcn_classification_weighted_forward.2} parent=0 // pred_fallthru
    _
  // Predicated region
  $region38: #{gcn_classification_weighted_forward.2} parent=0 // pred_check
    _
  $region39: #{gcn_classification_weighted_forward.2} parent=0 // pred_check_branch
    %580 = sbr.rel (0) target = $region41
  $region40: #{gcn_classification_weighted_forward.2} parent=0 // pred_region
    _
  $region41: #{gcn_classification_weighted_forward.2} parent=0 // pred_fallthru
    _

// kernel: gcn_classification_weighted_forward.3
$region0: #{gcn_classification_weighted_forward.3}
  #allocation0 [shape = 'u32[]', space=smem, size = 0x4, offset = 0x4, fixed_abs, tag = 'smem constant byte address 0x4 - core index']
  #allocation1 [shape = 'u32[144,128]{1,0:T(1,128)}', space=vmem, size = 0x12000, scoped, tag = 'internal scratch']
  #allocation2 [shape = 'f32[64,32]{1,0:T(8,128)}', space=vmem, size = 0x8000, scoped, tag = 'scratch operand']
  %s0 = inlined_call_operand.vmem [shape: bf16[64,64], index: 0, kind: input, shape index: {}]
  %s1 = inlined_call_operand.vmem [shape: bf16[64,32], index: 1, kind: input, shape index: {}, may-alias: {1,2}]
  %s2 = inlined_call_operand.vmem [shape: bf16[64,32], index: 2, kind: input, shape index: {}, may-alias: {1,2}]
  %s3 = inlined_call_operand.vmem [shape: f32[32,32], index: 3, kind: input, shape index: {}]
  %s4 = inlined_call_operand.vmem [shape: f32[32,32], index: 4, kind: input, shape index: {}]
  %s5 = inlined_call_operand.vmem [shape: f32[1,32], index: 5, kind: input, shape index: {}]
  %s6 = inlined_call_operand.vmem [shape: f32[64,32], index: 6, kind: input, shape index: {}]
  %s7 = inlined_call_operand.vmem [shape: f32[32,32], index: 7, kind: input, shape index: {}]
  %s8 = inlined_call_operand.vmem [shape: f32[1,32], index: 8, kind: input, shape index: {}]
  %s9 = inlined_call_operand.vmem [shape: f32[32,128], index: 9, kind: input, shape index: {}]
  %s10 = inlined_call_operand.vmem [shape: f32[1,128], index: 10, kind: input, shape index: {}]
  %s11 = inlined_call_operand.vmem [shape: f32[64,128], index: 11, kind: output, shape index: {}]
  %s12 = sld [smem:[#allocation0]]
  $region62: #{gcn_classification_weighted_forward.3} parent=0
    _
  %s14 = ssub.s32 1, %s12
  %s15 = scalar_select 0, %s14, %s12
  // Predicated region
  $region2: #{gcn_classification_weighted_forward.3} parent=0 // pred_check
    _
  $region3: #{gcn_classification_weighted_forward.3} parent=0 // pred_check_branch
    %17 = sbr.rel (0) target = $region5
  $region4: #{gcn_classification_weighted_forward.3} parent=0 // pred_region
    _
  $region5: #{gcn_classification_weighted_forward.3} parent=0 // pred_fallthru
    _
  // Predicated region
  $region6: #{gcn_classification_weighted_forward.3} parent=0 // pred_check
    _
  $region7: #{gcn_classification_weighted_forward.3} parent=0 // pred_check_branch
    %19 = sbr.rel (0) target = $region9
  $region8: #{gcn_classification_weighted_forward.3} parent=0 // pred_region
    _
  $region9: #{gcn_classification_weighted_forward.3} parent=0 // pred_fallthru
    _
  // Predicated region
  $region10: #{gcn_classification_weighted_forward.3} parent=0 // pred_check
    _
  $region11: #{gcn_classification_weighted_forward.3} parent=0 // pred_check_branch
    %21 = sbr.rel (0) target = $region13
  $region12: #{gcn_classification_weighted_forward.3} parent=0 // pred_region
    _
  $region13: #{gcn_classification_weighted_forward.3} parent=0 // pred_fallthru
    _
  // Predicated region
  $region14: #{gcn_classification_weighted_forward.3} parent=0 // pred_check
    _
  $region15: #{gcn_classification_weighted_forward.3} parent=0 // pred_check_branch
    %23 = sbr.rel (0) target = $region17
  $region16: #{gcn_classification_weighted_forward.3} parent=0 // pred_region
    _
  $region17: #{gcn_classification_weighted_forward.3} parent=0 // pred_fallthru
    _
  // Predicated region
  $region18: #{gcn_classification_weighted_forward.3} parent=0 // pred_check
    _
  $region19: #{gcn_classification_weighted_forward.3} parent=0 // pred_check_branch
    %25 = sbr.rel (0) target = $region21
  $region20: #{gcn_classification_weighted_forward.3} parent=0 // pred_region
    _
  $region21: #{gcn_classification_weighted_forward.3} parent=0 // pred_fallthru
    _
  // Predicated region
  $region22: #{gcn_classification_weighted_forward.3} parent=0 // pred_check
    _
  $region23: #{gcn_classification_weighted_forward.3} parent=0 // pred_check_branch
    %27 = sbr.rel (0) target = $region25
  $region24: #{gcn_classification_weighted_forward.3} parent=0 // pred_region
    _
  $region25: #{gcn_classification_weighted_forward.3} parent=0 // pred_fallthru
    _
  // Predicated region
  $region26: #{gcn_classification_weighted_forward.3} parent=0 // pred_check
    _
  $region27: #{gcn_classification_weighted_forward.3} parent=0 // pred_check_branch
    %29 = sbr.rel (0) target = $region29
  $region28: #{gcn_classification_weighted_forward.3} parent=0 // pred_region
    _
  $region29: #{gcn_classification_weighted_forward.3} parent=0 // pred_fallthru
    _
  // Predicated region
  $region30: #{gcn_classification_weighted_forward.3} parent=0 // pred_check
    _
  $region31: #{gcn_classification_weighted_forward.3} parent=0 // pred_check_branch
    %31 = sbr.rel (0) target = $region33
  $region32: #{gcn_classification_weighted_forward.3} parent=0 // pred_region
    _
  $region33: #{gcn_classification_weighted_forward.3} parent=0 // pred_fallthru
    _
  // Predicated region
  $region34: #{gcn_classification_weighted_forward.3} parent=0 // pred_check
    _
  $region35: #{gcn_classification_weighted_forward.3} parent=0 // pred_check_branch
    %33 = sbr.rel (0) target = $region37
  $region36: #{gcn_classification_weighted_forward.3} parent=0 // pred_region
    _
  $region37: #{gcn_classification_weighted_forward.3} parent=0 // pred_fallthru
    _
  // Predicated region
  $region38: #{gcn_classification_weighted_forward.3} parent=0 // pred_check
    _
  $region39: #{gcn_classification_weighted_forward.3} parent=0 // pred_check_branch
    %35 = sbr.rel (0) target = $region41
  $region40: #{gcn_classification_weighted_forward.3} parent=0 // pred_region
    _
  $region41: #{gcn_classification_weighted_forward.3} parent=0 // pred_fallthru
    _
  // Predicated region
  $region42: #{gcn_classification_weighted_forward.3} parent=0 // pred_check
    _
  $region43: #{gcn_classification_weighted_forward.3} parent=0 // pred_check_branch
    %37 = sbr.rel (0) target = $region45
  $region44: #{gcn_classification_weighted_forward.3} parent=0 // pred_region
    _
  $region45: #{gcn_classification_weighted_forward.3} parent=0 // pred_fallthru
    _
  %p39 = scmp.eq.s32.totalorder 0, 0
  // Predicated region
  $region46: #{gcn_classification_weighted_forward.3} parent=0 // pred_check
    %p40 = pneg %p39
  $region47: #{gcn_classification_weighted_forward.3} parent=0 // pred_check_branch
    %42 = sbr.rel (%p40) target = $region49
  $region48: #{gcn_classification_weighted_forward.3} parent=0 // pred_region
    %vm43 = vcmask 261120
    %44 = vst.msk [vmem:[#allocation2] sm:$0xff] %vm43, 0.0
    %45 = vst.msk [vmem:[#allocation2 + $0x8] sm:$0xff] %vm43, 0.0
    %46 = vst.msk [vmem:[#allocation2 + $0x10] sm:$0xff] %vm43, 0.0
    %47 = vst.msk [vmem:[#allocation2 + $0x18] sm:$0xff] %vm43, 0.0
    %48 = vst.msk [vmem:[#allocation2 + $0x20] sm:$0xff] %vm43, 0.0
    %49 = vst.msk [vmem:[#allocation2 + $0x28] sm:$0xff] %vm43, 0.0
    %50 = vst.msk [vmem:[#allocation2 + $0x30] sm:$0xff] %vm43, 0.0
    %51 = vst.msk [vmem:[#allocation2 + $0x38] sm:$0xff] %vm43, 0.0
  $region49: #{gcn_classification_weighted_forward.3} parent=0 // pred_fallthru
    _
  %v52 = vld [vmem:[#allocation2] sm:$0xff]
  %v53 = vld [vmem:[#allocation2 + $0x8] sm:$0xff]
  %v54 = vld [vmem:[#allocation2 + $0x10] sm:$0xff]
  %v55 = vld [vmem:[#allocation2 + $0x18] sm:$0xff]
  %v56 = vld [vmem:[#allocation2 + $0x20] sm:$0xff]
  %v57 = vld [vmem:[#allocation2 + $0x28] sm:$0xff]
  %v58 = vld [vmem:[#allocation2 + $0x30] sm:$0xff]
  %v59 = vld [vmem:[#allocation2 + $0x38] sm:$0xff]
  %v60 = vld [vmem:[%s0] sm:$0xf]
  %v61 = vld [vmem:[%s0 + $0x4] sm:$0xf]
  %v62 = vld [vmem:[%s0 + $0x8] sm:$0xf]
  %v63 = vld [vmem:[%s0 + $0xc] sm:$0xf]
  %v64 = vld [vmem:[%s0 + $0x10] sm:$0xf]
  %v65 = vld [vmem:[%s0 + $0x14] sm:$0xf]
  %v66 = vld [vmem:[%s0 + $0x18] sm:$0xf]
  %v67 = vld [vmem:[%s0 + $0x1c] sm:$0xf]
  %v68 = vld [vmem:[%s1] sm:$0xf]
  %v69 = vld [vmem:[%s1 + $0x4] sm:$0xf]
  %v70 = vld [vmem:[%s1 + $0x8] sm:$0xf]
  %v71 = vld [vmem:[%s1 + $0xc] sm:$0xf]
  %v72 = vld [vmem:[%s1 + $0x10] sm:$0xf]
  %v73 = vld [vmem:[%s1 + $0x14] sm:$0xf]
  %v74 = vld [vmem:[%s1 + $0x18] sm:$0xf]
  %v75 = vld [vmem:[%s1 + $0x1c] sm:$0xf]
  %v84 = vunpack.c.l.b16 %v60
  %v85 = vunpack.c.l.b16 %v61
  %v86 = vunpack.c.l.b16 %v62
  %v87 = vunpack.c.l.b16 %v63
  %v88 = vunpack.c.l.b16 %v64
  %v89 = vunpack.c.l.b16 %v65
  %v90 = vunpack.c.l.b16 %v66
  %v91 = vunpack.c.l.b16 %v67
  %v92 = vpack.c.b16 %v85, %v84
  %v93 = vpack.c.b16 %v87, %v86
  %v94 = vpack.c.b16 %v89, %v88
  %v95 = vpack.c.b16 %v91, %v90
  %v104 = vunpack.c.l.b16 %v68
  %v105 = vunpack.c.l.b16 %v69
  %v106 = vunpack.c.l.b16 %v70
  %v107 = vunpack.c.l.b16 %v71
  %v108 = vunpack.c.l.b16 %v72
  %v109 = vunpack.c.l.b16 %v73
  %v110 = vunpack.c.l.b16 %v74
  %v111 = vunpack.c.l.b16 %v75
  %v112 = vpack.c.b16 %v105, %v104
  %v113 = vpack.c.b16 %v107, %v106
  %v114 = vpack.c.b16 %v109, %v108
  %v115 = vpack.c.b16 %v111, %v110
  %vm120 = vcmask 523264
  %v122 = vsel %vm120, %v92, 0
  %v125 = vsel %vm120, %v93, 0
  %v128 = vsel %vm120, %v94, 0
  %v131 = vsel %vm120, %v95, 0
  %133 = vmatprep.subr.bf16.mxu0 0
  %134 = vmatpush1.bf16.msra.mxu0 0
  %135 = vmatprep.subr.bf16.mxu0 0
  %136 = vmatpush1.bf16.msra.mxu0 0
  %137 = vmatprep.subr.bf16.mxu0 0
  %138 = vmatpush1.bf16.msra.mxu0 0
  %139 = vmatprep.subr.bf16.mxu0 0
  %140 = vmatpush1.bf16.msra.mxu0 0
  %141 = vmatprep.subr.bf16.mxu0 0
  %142 = vmatpush1.bf16.msra.mxu0 %v115
  %143 = vmatprep.subr.bf16.mxu0 0
  %144 = vmatpush1.bf16.msra.mxu0 %v114
  %145 = vmatprep.subr.bf16.mxu0 0
  %146 = vmatpush1.bf16.msra.mxu0 %v113
  %147 = vmatprep.subr.bf16.mxu0 0
  %148 = vmatpush1.bf16.msra.mxu0 %v112
  %149 = vmatprep.subr.bf16.mxu0 0
  %150 = vmatpush2.bf16.msra.mxu0 0
  %151 = vmatprep.subr.bf16.mxu0 0
  %152 = vmatpush2.bf16.msra.mxu0 0
  %153 = vmatprep.subr.bf16.mxu0 0
  %154 = vmatpush2.bf16.msra.mxu0 0
  %155 = vmatprep.subr.bf16.mxu0 0
  %156 = vmatpush2.bf16.msra.mxu0 0
  %157 = vmatprep.subr.bf16.mxu0 0
  %158 = vmatpush2.bf16.msra.mxu0 0
  %159 = vmatprep.subr.bf16.mxu0 0
  %160 = vmatpush2.bf16.msra.mxu0 0
  %161 = vmatprep.subr.bf16.mxu0 0
  %162 = vmatpush2.bf16.msra.mxu0 0
  %163 = vmatprep.subr.bf16.mxu0 0
  %164 = vmatpush2.bf16.msra.mxu0 0
  %165 = vmatprep.mubr.bf16.mxu0 0
  %166 = vmatmul.mubr.bf16.gmra.mxu0 %v122
  %v167 = vpop.f32.mrf.mxu0
  %v168 = vadd.f32 0.0, %v167
  %v169 = vpop.f32.mrf.mxu0
  %v170 = vpop.f32.mrf.mxu0
  %v171 = vadd.f32 0.0, %v170
  %v172 = vpop.f32.mrf.mxu0
  %173 = vmatprep.mubr.bf16.mxu0 0
  %174 = vmatmul.mubr.bf16.gmra.mxu0 %v125
  %v175 = vpop.f32.mrf.mxu0
  %v176 = vadd.f32 0.0, %v175
  %v177 = vpop.f32.mrf.mxu0
  %v178 = vpop.f32.mrf.mxu0
  %v179 = vadd.f32 0.0, %v178
  %v180 = vpop.f32.mrf.mxu0
  %181 = vmatprep.mubr.bf16.mxu0 0
  %182 = vmatmul.mubr.bf16.gmra.mxu0 %v128
  %v183 = vpop.f32.mrf.mxu0
  %v184 = vadd.f32 0.0, %v183
  %v185 = vpop.f32.mrf.mxu0
  %v186 = vpop.f32.mrf.mxu0
  %v187 = vadd.f32 0.0, %v186
  %v188 = vpop.f32.mrf.mxu0
  %189 = vmatprep.mubr.bf16.mxu0 0
  %190 = vmatmul.mubr.bf16.gmra.mxu0 %v131
  %v191 = vpop.f32.mrf.mxu0
  %v192 = vadd.f32 0.0, %v191
  %v193 = vpop.f32.mrf.mxu0
  %v194 = vpop.f32.mrf.mxu0
  %v195 = vadd.f32 0.0, %v194
  %v196 = vpop.f32.mrf.mxu0
  %197 = vdwg.mxu0
  %v198 = vadd.f32 %v52, %v168
  %v199 = vadd.f32 %v53, %v171
  %v200 = vadd.f32 %v54, %v176
  %v201 = vadd.f32 %v55, %v179
  %v202 = vadd.f32 %v56, %v184
  %v203 = vadd.f32 %v57, %v187
  %v204 = vadd.f32 %v58, %v192
  %v205 = vadd.f32 %v59, %v195
  %vm206 = vcmask 261120
  %207 = vst.msk [vmem:[#allocation2] sm:$0xff] %vm206, %v198
  %208 = vst.msk [vmem:[#allocation2 + $0x8] sm:$0xff] %vm206, %v199
  %209 = vst.msk [vmem:[#allocation2 + $0x10] sm:$0xff] %vm206, %v200
  %210 = vst.msk [vmem:[#allocation2 + $0x18] sm:$0xff] %vm206, %v201
  %211 = vst.msk [vmem:[#allocation2 + $0x20] sm:$0xff] %vm206, %v202
  %212 = vst.msk [vmem:[#allocation2 + $0x28] sm:$0xff] %vm206, %v203
  %213 = vst.msk [vmem:[#allocation2 + $0x30] sm:$0xff] %vm206, %v204
  %214 = vst.msk [vmem:[#allocation2 + $0x38] sm:$0xff] %vm206, %v205
  // Predicated region
  $region50: #{gcn_classification_weighted_forward.3} parent=0 // pred_check
    %p215 = pneg %p39
  $region51: #{gcn_classification_weighted_forward.3} parent=0 // pred_check_branch
    %217 = sbr.rel (%p215) target = $region53
  $region52: #{gcn_classification_weighted_forward.3} parent=0 // pred_region
    %v218 = vld [vmem:[#allocation2] sm:$0xff]
    %v219 = vld [vmem:[#allocation2 + $0x8] sm:$0xff]
    %v220 = vld [vmem:[#allocation2 + $0x10] sm:$0xff]
    %v221 = vld [vmem:[#allocation2 + $0x18] sm:$0xff]
    %v222 = vld [vmem:[#allocation2 + $0x20] sm:$0xff]
    %v223 = vld [vmem:[#allocation2 + $0x28] sm:$0xff]
    %v224 = vld [vmem:[#allocation2 + $0x30] sm:$0xff]
    %v225 = vld [vmem:[#allocation2 + $0x38] sm:$0xff]
    %vm226 = vcmp.ge.f32.partialorder %v218, 0.0
    %vm227 = vcmp.ge.f32.partialorder %v219, 0.0
    %vm228 = vcmp.ge.f32.partialorder %v220, 0.0
    %vm229 = vcmp.ge.f32.partialorder %v221, 0.0
    %vm230 = vcmp.ge.f32.partialorder %v222, 0.0
    %vm231 = vcmp.ge.f32.partialorder %v223, 0.0
    %vm232 = vcmp.ge.f32.partialorder %v224, 0.0
    %vm233 = vcmp.ge.f32.partialorder %v225, 0.0
    %v234 = vmul.f32 %v218, 0.01
    %v235 = vmul.f32 %v219, 0.01
    %v236 = vmul.f32 %v220, 0.01
    %v237 = vmul.f32 %v221, 0.01
    %v238 = vmul.f32 %v222, 0.01
    %v239 = vmul.f32 %v223, 0.01
    %v240 = vmul.f32 %v224, 0.01
    %v241 = vmul.f32 %v225, 0.01
    %v242 = vsel %vm226, %v218, %v234
    %v243 = vsel %vm227, %v219, %v235
    %v244 = vsel %vm228, %v220, %v236
    %v245 = vsel %vm229, %v221, %v237
    %v246 = vsel %vm230, %v222, %v238
    %v247 = vsel %vm231, %v223, %v239
    %v248 = vsel %vm232, %v224, %v240
    %v249 = vsel %vm233, %v225, %v241
    %v250 = vld [vmem:[%s2] sm:$0xf]
    %v251 = vld [vmem:[%s2 + $0x4] sm:$0xf]
    %v252 = vld [vmem:[%s2 + $0x8] sm:$0xf]
    %v253 = vld [vmem:[%s2 + $0xc] sm:$0xf]
    %v254 = vld [vmem:[%s2 + $0x10] sm:$0xf]
    %v255 = vld [vmem:[%s2 + $0x14] sm:$0xf]
    %v256 = vld [vmem:[%s2 + $0x18] sm:$0xf]
    %v257 = vld [vmem:[%s2 + $0x1c] sm:$0xf]
    %v258 = vunpack.c.l.bf16 %v250
    %v259 = vunpack.c.l.bf16 %v251
    %v260 = vunpack.c.l.bf16 %v252
    %v261 = vunpack.c.l.bf16 %v253
    %v262 = vunpack.c.l.bf16 %v254
    %v263 = vunpack.c.l.bf16 %v255
    %v264 = vunpack.c.l.bf16 %v256
    %v265 = vunpack.c.l.bf16 %v257
    %v266 = vld [vmem:[%s3] sm:$0xff]
    %v267 = vld [vmem:[%s3 + $0x8] sm:$0xff]
    %v268 = vld [vmem:[%s3 + $0x10] sm:$0xff]
    %v269 = vld [vmem:[%s3 + $0x18] sm:$0xff]
    %v270 = vld [vmem:[%s4] sm:$0xff]
    %v271 = vld [vmem:[%s4 + $0x8] sm:$0xff]
    %v272 = vld [vmem:[%s4 + $0x10] sm:$0xff]
    %v273 = vld [vmem:[%s4 + $0x18] sm:$0xff]
    %v275 = vsel %vm206, %v242, 0
    %v278 = vsel %vm206, %v243, 0
    %v281 = vsel %vm206, %v244, 0
    %v284 = vsel %vm206, %v245, 0
    %v287 = vsel %vm206, %v246, 0
    %v290 = vsel %vm206, %v247, 0
    %v293 = vsel %vm206, %v248, 0
    %v296 = vsel %vm206, %v249, 0
    %298 = vmatprep.subr.mxu0 0.0
    %299 = vmatpush1.msra.mxu0 0.0
    %300 = vmatprep.subr.mxu0 0.0
    %301 = vmatpush1.msra.mxu0 0.0
    %302 = vmatprep.subr.mxu0 0.0
    %303 = vmatpush1.msra.mxu0 0.0
    %304 = vmatprep.subr.mxu0 0.0
    %305 = vmatpush1.msra.mxu0 0.0
    %306 = vmatprep.subr.mxu0 0.0
    %307 = vmatpush1.msra.mxu0 0.0
    %308 = vmatprep.subr.mxu0 0.0
    %309 = vmatpush1.msra.mxu0 0.0
    %310 = vmatprep.subr.mxu0 0.0
    %311 = vmatpush1.msra.mxu0 0.0
    %312 = vmatprep.subr.mxu0 0.0
    %313 = vmatpush1.msra.mxu0 0.0
    %314 = vmatprep.subr.mxu0 0.0
    %315 = vmatpush1.msra.mxu0 0.0
    %316 = vmatprep.subr.mxu0 0.0
    %317 = vmatpush1.msra.mxu0 0.0
    %318 = vmatprep.subr.mxu0 0.0
    %319 = vmatpush1.msra.mxu0 0.0
    %320 = vmatprep.subr.mxu0 0.0
    %321 = vmatpush1.msra.mxu0 0.0
    %322 = vmatprep.subr.mxu0 0.0
    %323 = vmatpush1.msra.mxu0 %v273
    %324 = vmatprep.subr.mxu0 0.0
    %325 = vmatpush1.msra.mxu0 %v272
    %326 = vmatprep.subr.mxu0 0.0
    %327 = vmatpush1.msra.mxu0 %v271
    %328 = vmatprep.subr.mxu0 0.0
    %329 = vmatpush1.msra.mxu0 %v270
    %330 = vmatprep.subr.mxu0 0.0
    %331 = vmatpush2.msra.mxu0 0.0
    %332 = vmatprep.subr.mxu0 0.0
    %333 = vmatpush2.msra.mxu0 0.0
    %334 = vmatprep.subr.mxu0 0.0
    %335 = vmatpush2.msra.mxu0 0.0
    %336 = vmatprep.subr.mxu0 0.0
    %337 = vmatpush2.msra.mxu0 0.0
    %338 = vmatprep.subr.mxu0 0.0
    %339 = vmatpush2.msra.mxu0 0.0
    %340 = vmatprep.subr.mxu0 0.0
    %341 = vmatpush2.msra.mxu0 0.0
    %342 = vmatprep.subr.mxu0 0.0
    %343 = vmatpush2.msra.mxu0 0.0
    %344 = vmatprep.subr.mxu0 0.0
    %345 = vmatpush2.msra.mxu0 0.0
    %346 = vmatprep.subr.mxu0 0.0
    %347 = vmatpush2.msra.mxu0 0.0
    %348 = vmatprep.subr.mxu0 0.0
    %349 = vmatpush2.msra.mxu0 0.0
    %350 = vmatprep.subr.mxu0 0.0
    %351 = vmatpush2.msra.mxu0 0.0
    %352 = vmatprep.subr.mxu0 0.0
    %353 = vmatpush2.msra.mxu0 0.0
    %354 = vmatprep.subr.mxu0 0.0
    %355 = vmatpush2.msra.mxu0 0.0
    %356 = vmatprep.subr.mxu0 0.0
    %357 = vmatpush2.msra.mxu0 0.0
    %358 = vmatprep.subr.mxu0 0.0
    %359 = vmatpush2.msra.mxu0 0.0
    %360 = vmatprep.subr.mxu0 0.0
    %361 = vmatpush2.msra.mxu0 0.0
    %362 = vmatprep.mubr.f32.mxu0 0.0
    %363 = vmatmul.mubr.f32.gmra.mxu0 %v275
    %v364 = vpop.f32.mrf.mxu0
    %v365 = vadd.f32 0.0, %v364
    %v366 = vpop.f32.mrf.mxu0
    %367 = vmatprep.mubr.f32.mxu0 0.0
    %368 = vmatmul.mubr.f32.gmra.mxu0 %v278
    %v369 = vpop.f32.mrf.mxu0
    %v370 = vadd.f32 0.0, %v369
    %v371 = vpop.f32.mrf.mxu0
    %372 = vmatprep.mubr.f32.mxu0 0.0
    %373 = vmatmul.mubr.f32.gmra.mxu0 %v281
    %v374 = vpop.f32.mrf.mxu0
    %v375 = vadd.f32 0.0, %v374
    %v376 = vpop.f32.mrf.mxu0
    %377 = vmatprep.mubr.f32.mxu0 0.0
    %378 = vmatmul.mubr.f32.gmra.mxu0 %v284
    %v379 = vpop.f32.mrf.mxu0
    %v380 = vadd.f32 0.0, %v379
    %v381 = vpop.f32.mrf.mxu0
    %382 = vmatprep.mubr.f32.mxu0 0.0
    %383 = vmatmul.mubr.f32.gmra.mxu0 %v287
    %v384 = vpop.f32.mrf.mxu0
    %v385 = vadd.f32 0.0, %v384
    %v386 = vpop.f32.mrf.mxu0
    %387 = vmatprep.mubr.f32.mxu0 0.0
    %388 = vmatmul.mubr.f32.gmra.mxu0 %v290
    %v389 = vpop.f32.mrf.mxu0
    %v390 = vadd.f32 0.0, %v389
    %v391 = vpop.f32.mrf.mxu0
    %392 = vmatprep.mubr.f32.mxu0 0.0
    %393 = vmatmul.mubr.f32.gmra.mxu0 %v293
    %v394 = vpop.f32.mrf.mxu0
    %v395 = vadd.f32 0.0, %v394
    %v396 = vpop.f32.mrf.mxu0
    %397 = vmatprep.mubr.f32.mxu0 0.0
    %398 = vmatmul.mubr.f32.gmra.mxu0 %v296
    %v399 = vpop.f32.mrf.mxu0
    %v400 = vadd.f32 0.0, %v399
    %v401 = vpop.f32.mrf.mxu0
    %402 = vdwg.mxu0
    %v404 = vsel %vm206, %v258, 0
    %v407 = vsel %vm206, %v259, 0
    %v410 = vsel %vm206, %v260, 0
    %v413 = vsel %vm206, %v261, 0
    %v416 = vsel %vm206, %v262, 0
    %v419 = vsel %vm206, %v263, 0
    %v422 = vsel %vm206, %v264, 0
    %v425 = vsel %vm206, %v265, 0
    %427 = vmatprep.subr.mxu0 0.0
    %428 = vmatpush1.msra.mxu0 0.0
    %429 = vmatprep.subr.mxu0 0.0
    %430 = vmatpush1.msra.mxu0 0.0
    %431 = vmatprep.subr.mxu0 0.0
    %432 = vmatpush1.msra.mxu0 0.0
    %433 = vmatprep.subr.mxu0 0.0
    %434 = vmatpush1.msra.mxu0 0.0
    %435 = vmatprep.subr.mxu0 0.0
    %436 = vmatpush1.msra.mxu0 0.0
    %437 = vmatprep.subr.mxu0 0.0
    %438 = vmatpush1.msra.mxu0 0.0
    %439 = vmatprep.subr.mxu0 0.0
    %440 = vmatpush1.msra.mxu0 0.0
    %441 = vmatprep.subr.mxu0 0.0
    %442 = vmatpush1.msra.mxu0 0.0
    %443 = vmatprep.subr.mxu0 0.0
    %444 = vmatpush1.msra.mxu0 0.0
    %445 = vmatprep.subr.mxu0 0.0
    %446 = vmatpush1.msra.mxu0 0.0
    %447 = vmatprep.subr.mxu0 0.0
    %448 = vmatpush1.msra.mxu0 0.0
    %449 = vmatprep.subr.mxu0 0.0
    %450 = vmatpush1.msra.mxu0 0.0
    %451 = vmatprep.subr.mxu0 0.0
    %452 = vmatpush1.msra.mxu0 %v269
    %453 = vmatprep.subr.mxu0 0.0
    %454 = vmatpush1.msra.mxu0 %v268
    %455 = vmatprep.subr.mxu0 0.0
    %456 = vmatpush1.msra.mxu0 %v267
    %457 = vmatprep.subr.mxu0 0.0
    %458 = vmatpush1.msra.mxu0 %v266
    %459 = vmatprep.subr.mxu0 0.0
    %460 = vmatpush2.msra.mxu0 0.0
    %461 = vmatprep.subr.mxu0 0.0
    %462 = vmatpush2.msra.mxu0 0.0
    %463 = vmatprep.subr.mxu0 0.0
    %464 = vmatpush2.msra.mxu0 0.0
    %465 = vmatprep.subr.mxu0 0.0
    %466 = vmatpush2.msra.mxu0 0.0
    %467 = vmatprep.subr.mxu0 0.0
    %468 = vmatpush2.msra.mxu0 0.0
    %469 = vmatprep.subr.mxu0 0.0
    %470 = vmatpush2.msra.mxu0 0.0
    %471 = vmatprep.subr.mxu0 0.0
    %472 = vmatpush2.msra.mxu0 0.0
    %473 = vmatprep.subr.mxu0 0.0
    %474 = vmatpush2.msra.mxu0 0.0
    %475 = vmatprep.subr.mxu0 0.0
    %476 = vmatpush2.msra.mxu0 0.0
    %477 = vmatprep.subr.mxu0 0.0
    %478 = vmatpush2.msra.mxu0 0.0
    %479 = vmatprep.subr.mxu0 0.0
    %480 = vmatpush2.msra.mxu0 0.0
    %481 = vmatprep.subr.mxu0 0.0
    %482 = vmatpush2.msra.mxu0 0.0
    %483 = vmatprep.subr.mxu0 0.0
    %484 = vmatpush2.msra.mxu0 0.0
    %485 = vmatprep.subr.mxu0 0.0
    %486 = vmatpush2.msra.mxu0 0.0
    %487 = vmatprep.subr.mxu0 0.0
    %488 = vmatpush2.msra.mxu0 0.0
    %489 = vmatprep.subr.mxu0 0.0
    %490 = vmatpush2.msra.mxu0 0.0
    %491 = vmatprep.mubr.f32.mxu0 0.0
    %492 = vmatmul.mubr.f32.gmra.mxu0 %v404
    %v493 = vpop.f32.mrf.mxu0
    %v494 = vadd.f32 %v365, %v493
    %v495 = vpop.f32.mrf.mxu0
    %496 = vmatprep.mubr.f32.mxu0 0.0
    %497 = vmatmul.mubr.f32.gmra.mxu0 %v407
    %v498 = vpop.f32.mrf.mxu0
    %v499 = vadd.f32 %v370, %v498
    %v500 = vpop.f32.mrf.mxu0
    %501 = vmatprep.mubr.f32.mxu0 0.0
    %502 = vmatmul.mubr.f32.gmra.mxu0 %v410
    %v503 = vpop.f32.mrf.mxu0
    %v504 = vadd.f32 %v375, %v503
    %v505 = vpop.f32.mrf.mxu0
    %506 = vmatprep.mubr.f32.mxu0 0.0
    %507 = vmatmul.mubr.f32.gmra.mxu0 %v413
    %v508 = vpop.f32.mrf.mxu0
    %v509 = vadd.f32 %v380, %v508
    %v510 = vpop.f32.mrf.mxu0
    %511 = vmatprep.mubr.f32.mxu0 0.0
    %512 = vmatmul.mubr.f32.gmra.mxu0 %v416
    %v513 = vpop.f32.mrf.mxu0
    %v514 = vadd.f32 %v385, %v513
    %v515 = vpop.f32.mrf.mxu0
    %516 = vmatprep.mubr.f32.mxu0 0.0
    %517 = vmatmul.mubr.f32.gmra.mxu0 %v419
    %v518 = vpop.f32.mrf.mxu0
    %v519 = vadd.f32 %v390, %v518
    %v520 = vpop.f32.mrf.mxu0
    %521 = vmatprep.mubr.f32.mxu0 0.0
    %522 = vmatmul.mubr.f32.gmra.mxu0 %v422
    %v523 = vpop.f32.mrf.mxu0
    %v524 = vadd.f32 %v395, %v523
    %v525 = vpop.f32.mrf.mxu0
    %526 = vmatprep.mubr.f32.mxu0 0.0
    %527 = vmatmul.mubr.f32.gmra.mxu0 %v425
    %v528 = vpop.f32.mrf.mxu0
    %v529 = vadd.f32 %v400, %v528
    %v530 = vpop.f32.mrf.mxu0
    %531 = vdwg.mxu0
    %v532 = vld [vmem:[%s5] sm:$0x1]
    %v534 = vlaneseq
    %v535 = vshrl.u32 %v534, 7
    %v536 = vsub.s32 0, %v535
    %v537 = vrot.slane %v532, %v536
    %v539 = vadd.f32 %v494, %v537
    %v540 = vadd.f32 %v499, %v537
    %v541 = vadd.f32 %v504, %v537
    %v542 = vadd.f32 %v509, %v537
    %v543 = vadd.f32 %v514, %v537
    %v544 = vadd.f32 %v519, %v537
    %v545 = vadd.f32 %v524, %v537
    %v546 = vadd.f32 %v529, %v537
    %v547 = vmax.f32 %v539, 0.0
    %v548 = vmax.f32 %v540, 0.0
    %v549 = vmax.f32 %v541, 0.0
    %v550 = vmax.f32 %v542, 0.0
    %v551 = vmax.f32 %v543, 0.0
    %v552 = vmax.f32 %v544, 0.0
    %v553 = vmax.f32 %v545, 0.0
    %v554 = vmax.f32 %v546, 0.0
    %v555 = vld [vmem:[%s6] sm:$0xff]
    %v556 = vld [vmem:[%s6 + $0x8] sm:$0xff]
    %v557 = vld [vmem:[%s6 + $0x10] sm:$0xff]
    %v558 = vld [vmem:[%s6 + $0x18] sm:$0xff]
    %v559 = vld [vmem:[%s6 + $0x20] sm:$0xff]
    %v560 = vld [vmem:[%s6 + $0x28] sm:$0xff]
    %v561 = vld [vmem:[%s6 + $0x30] sm:$0xff]
    %v562 = vld [vmem:[%s6 + $0x38] sm:$0xff]
    %v563 = vmul.f32 %v547, %v555
    %v564 = vmul.f32 %v548, %v556
    %v565 = vmul.f32 %v549, %v557
    %v566 = vmul.f32 %v550, %v558
    %v567 = vmul.f32 %v551, %v559
    %v568 = vmul.f32 %v552, %v560
    %v569 = vmul.f32 %v553, %v561
    %v570 = vmul.f32 %v554, %v562
    %v571 = vld [vmem:[%s7] sm:$0xff]
    %v572 = vld [vmem:[%s7 + $0x8] sm:$0xff]
    %v573 = vld [vmem:[%s7 + $0x10] sm:$0xff]
    %v574 = vld [vmem:[%s7 + $0x18] sm:$0xff]
    %v575 = vld [vmem:[%s8] sm:$0x1]
    %v577 = vlaneseq
    %v578 = vshrl.u32 %v577, 7
    %v579 = vsub.s32 0, %v578
    %v580 = vrot.slane %v575, %v579
    %v583 = vsel %vm206, %v563, 0
    %v586 = vsel %vm206, %v564, 0
    %v589 = vsel %vm206, %v565, 0
    %v592 = vsel %vm206, %v566, 0
    %v595 = vsel %vm206, %v567, 0
    %v598 = vsel %vm206, %v568, 0
    %v601 = vsel %vm206, %v569, 0
    %v604 = vsel %vm206, %v570, 0
    %606 = vmatprep.subr.mxu0 0.0
    %607 = vmatpush1.msra.mxu0 0.0
    %608 = vmatprep.subr.mxu0 0.0
    %609 = vmatpush1.msra.mxu0 0.0
    %610 = vmatprep.subr.mxu0 0.0
    %611 = vmatpush1.msra.mxu0 0.0
    %612 = vmatprep.subr.mxu0 0.0
    %613 = vmatpush1.msra.mxu0 0.0
    %614 = vmatprep.subr.mxu0 0.0
    %615 = vmatpush1.msra.mxu0 0.0
    %616 = vmatprep.subr.mxu0 0.0
    %617 = vmatpush1.msra.mxu0 0.0
    %618 = vmatprep.subr.mxu0 0.0
    %619 = vmatpush1.msra.mxu0 0.0
    %620 = vmatprep.subr.mxu0 0.0
    %621 = vmatpush1.msra.mxu0 0.0
    %622 = vmatprep.subr.mxu0 0.0
    %623 = vmatpush1.msra.mxu0 0.0
    %624 = vmatprep.subr.mxu0 0.0
    %625 = vmatpush1.msra.mxu0 0.0
    %626 = vmatprep.subr.mxu0 0.0
    %627 = vmatpush1.msra.mxu0 0.0
    %628 = vmatprep.subr.mxu0 0.0
    %629 = vmatpush1.msra.mxu0 0.0
    %630 = vmatprep.subr.mxu0 0.0
    %631 = vmatpush1.msra.mxu0 %v574
    %632 = vmatprep.subr.mxu0 0.0
    %633 = vmatpush1.msra.mxu0 %v573
    %634 = vmatprep.subr.mxu0 0.0
    %635 = vmatpush1.msra.mxu0 %v572
    %636 = vmatprep.subr.mxu0 0.0
    %637 = vmatpush1.msra.mxu0 %v571
    %638 = vmatprep.subr.mxu0 0.0
    %639 = vmatpush2.msra.mxu0 0.0
    %640 = vmatprep.subr.mxu0 0.0
    %641 = vmatpush2.msra.mxu0 0.0
    %642 = vmatprep.subr.mxu0 0.0
    %643 = vmatpush2.msra.mxu0 0.0
    %644 = vmatprep.subr.mxu0 0.0
    %645 = vmatpush2.msra.mxu0 0.0
    %646 = vmatprep.subr.mxu0 0.0
    %647 = vmatpush2.msra.mxu0 0.0
    %648 = vmatprep.subr.mxu0 0.0
    %649 = vmatpush2.msra.mxu0 0.0
    %650 = vmatprep.subr.mxu0 0.0
    %651 = vmatpush2.msra.mxu0 0.0
    %652 = vmatprep.subr.mxu0 0.0
    %653 = vmatpush2.msra.mxu0 0.0
    %654 = vmatprep.subr.mxu0 0.0
    %655 = vmatpush2.msra.mxu0 0.0
    %656 = vmatprep.subr.mxu0 0.0
    %657 = vmatpush2.msra.mxu0 0.0
    %658 = vmatprep.subr.mxu0 0.0
    %659 = vmatpush2.msra.mxu0 0.0
    %660 = vmatprep.subr.mxu0 0.0
    %661 = vmatpush2.msra.mxu0 0.0
    %662 = vmatprep.subr.mxu0 0.0
    %663 = vmatpush2.msra.mxu0 0.0
    %664 = vmatprep.subr.mxu0 0.0
    %665 = vmatpush2.msra.mxu0 0.0
    %666 = vmatprep.subr.mxu0 0.0
    %667 = vmatpush2.msra.mxu0 0.0
    %668 = vmatprep.subr.mxu0 0.0
    %669 = vmatpush2.msra.mxu0 0.0
    %670 = vmatprep.mubr.f32.mxu0 0.0
    %671 = vmatmul.mubr.f32.gmra.mxu0 %v583
    %v672 = vpop.f32.mrf.mxu0
    %v673 = vadd.f32 %v580, %v672
    %v674 = vpop.f32.mrf.mxu0
    %675 = vmatprep.mubr.f32.mxu0 0.0
    %676 = vmatmul.mubr.f32.gmra.mxu0 %v586
    %v677 = vpop.f32.mrf.mxu0
    %v678 = vadd.f32 %v580, %v677
    %v679 = vpop.f32.mrf.mxu0
    %680 = vmatprep.mubr.f32.mxu0 0.0
    %681 = vmatmul.mubr.f32.gmra.mxu0 %v589
    %v682 = vpop.f32.mrf.mxu0
    %v683 = vadd.f32 %v580, %v682
    %v684 = vpop.f32.mrf.mxu0
    %685 = vmatprep.mubr.f32.mxu0 0.0
    %686 = vmatmul.mubr.f32.gmra.mxu0 %v592
    %v687 = vpop.f32.mrf.mxu0
    %v688 = vadd.f32 %v580, %v687
    %v689 = vpop.f32.mrf.mxu0
    %690 = vmatprep.mubr.f32.mxu0 0.0
    %691 = vmatmul.mubr.f32.gmra.mxu0 %v595
    %v692 = vpop.f32.mrf.mxu0
    %v693 = vadd.f32 %v580, %v692
    %v694 = vpop.f32.mrf.mxu0
    %695 = vmatprep.mubr.f32.mxu0 0.0
    %696 = vmatmul.mubr.f32.gmra.mxu0 %v598
    %v697 = vpop.f32.mrf.mxu0
    %v698 = vadd.f32 %v580, %v697
    %v699 = vpop.f32.mrf.mxu0
    %700 = vmatprep.mubr.f32.mxu0 0.0
    %701 = vmatmul.mubr.f32.gmra.mxu0 %v601
    %v702 = vpop.f32.mrf.mxu0
    %v703 = vadd.f32 %v580, %v702
    %v704 = vpop.f32.mrf.mxu0
    %705 = vmatprep.mubr.f32.mxu0 0.0
    %706 = vmatmul.mubr.f32.gmra.mxu0 %v604
    %v707 = vpop.f32.mrf.mxu0
    %v708 = vadd.f32 %v580, %v707
    %v709 = vpop.f32.mrf.mxu0
    %710 = vdwg.mxu0
    %v711 = vmax.f32 %v673, 0.0
    %v712 = vmax.f32 %v678, 0.0
    %v713 = vmax.f32 %v683, 0.0
    %v714 = vmax.f32 %v688, 0.0
    %v715 = vmax.f32 %v693, 0.0
    %v716 = vmax.f32 %v698, 0.0
    %v717 = vmax.f32 %v703, 0.0
    %v718 = vmax.f32 %v708, 0.0
    %v719 = vld [vmem:[%s9] sm:$0xff]
    %v720 = vld [vmem:[%s9 + $0x8] sm:$0xff]
    %v721 = vld [vmem:[%s9 + $0x10] sm:$0xff]
    %v722 = vld [vmem:[%s9 + $0x18] sm:$0xff]
    %v723 = vld [vmem:[%s10] sm:$0x1]
    %v725 = vlaneseq
    %v726 = vshrl.u32 %v725, 7
    %v727 = vsub.s32 0, %v726
    %v728 = vrot.slane %v723, %v727
    %v731 = vsel %vm206, %v711, 0
    %v734 = vsel %vm206, %v712, 0
    %v737 = vsel %vm206, %v713, 0
    %v740 = vsel %vm206, %v714, 0
    %v743 = vsel %vm206, %v715, 0
    %v746 = vsel %vm206, %v716, 0
    %v749 = vsel %vm206, %v717, 0
    %v752 = vsel %vm206, %v718, 0
    %754 = vmatprep.subr.mxu0 0.0
    %755 = vmatpush1.msra.mxu0 0.0
    %756 = vmatprep.subr.mxu0 0.0
    %757 = vmatpush1.msra.mxu0 0.0
    %758 = vmatprep.subr.mxu0 0.0
    %759 = vmatpush1.msra.mxu0 0.0
    %760 = vmatprep.subr.mxu0 0.0
    %761 = vmatpush1.msra.mxu0 0.0
    %762 = vmatprep.subr.mxu0 0.0
    %763 = vmatpush1.msra.mxu0 0.0
    %764 = vmatprep.subr.mxu0 0.0
    %765 = vmatpush1.msra.mxu0 0.0
    %766 = vmatprep.subr.mxu0 0.0
    %767 = vmatpush1.msra.mxu0 0.0
    %768 = vmatprep.subr.mxu0 0.0
    %769 = vmatpush1.msra.mxu0 0.0
    %770 = vmatprep.subr.mxu0 0.0
    %771 = vmatpush1.msra.mxu0 0.0
    %772 = vmatprep.subr.mxu0 0.0
    %773 = vmatpush1.msra.mxu0 0.0
    %774 = vmatprep.subr.mxu0 0.0
    %775 = vmatpush1.msra.mxu0 0.0
    %776 = vmatprep.subr.mxu0 0.0
    %777 = vmatpush1.msra.mxu0 0.0
    %778 = vmatprep.subr.mxu0 0.0
    %779 = vmatpush1.msra.mxu0 %v722
    %780 = vmatprep.subr.mxu0 0.0
    %781 = vmatpush1.msra.mxu0 %v721
    %782 = vmatprep.subr.mxu0 0.0
    %783 = vmatpush1.msra.mxu0 %v720
    %784 = vmatprep.subr.mxu0 0.0
    %785 = vmatpush1.msra.mxu0 %v719
    %786 = vmatprep.subr.mxu0 0.0
    %787 = vmatpush2.msra.mxu0 0.0
    %788 = vmatprep.subr.mxu0 0.0
    %789 = vmatpush2.msra.mxu0 0.0
    %790 = vmatprep.subr.mxu0 0.0
    %791 = vmatpush2.msra.mxu0 0.0
    %792 = vmatprep.subr.mxu0 0.0
    %793 = vmatpush2.msra.mxu0 0.0
    %794 = vmatprep.subr.mxu0 0.0
    %795 = vmatpush2.msra.mxu0 0.0
    %796 = vmatprep.subr.mxu0 0.0
    %797 = vmatpush2.msra.mxu0 0.0
    %798 = vmatprep.subr.mxu0 0.0
    %799 = vmatpush2.msra.mxu0 0.0
    %800 = vmatprep.subr.mxu0 0.0
    %801 = vmatpush2.msra.mxu0 0.0
    %802 = vmatprep.subr.mxu0 0.0
    %803 = vmatpush2.msra.mxu0 0.0
    %804 = vmatprep.subr.mxu0 0.0
    %805 = vmatpush2.msra.mxu0 0.0
    %806 = vmatprep.subr.mxu0 0.0
    %807 = vmatpush2.msra.mxu0 0.0
    %808 = vmatprep.subr.mxu0 0.0
    %809 = vmatpush2.msra.mxu0 0.0
    %810 = vmatprep.subr.mxu0 0.0
    %811 = vmatpush2.msra.mxu0 0.0
    %812 = vmatprep.subr.mxu0 0.0
    %813 = vmatpush2.msra.mxu0 0.0
    %814 = vmatprep.subr.mxu0 0.0
    %815 = vmatpush2.msra.mxu0 0.0
    %816 = vmatprep.subr.mxu0 0.0
    %817 = vmatpush2.msra.mxu0 0.0
    %818 = vmatprep.mubr.f32.mxu0 0.0
    %819 = vmatmul.mubr.f32.gmra.mxu0 %v731
    %v820 = vpop.f32.mrf.mxu0
    %v821 = vadd.f32 %v728, %v820
    %v822 = vpop.f32.mrf.mxu0
    %823 = vmatprep.mubr.f32.mxu0 0.0
    %824 = vmatmul.mubr.f32.gmra.mxu0 %v734
    %v825 = vpop.f32.mrf.mxu0
    %v826 = vadd.f32 %v728, %v825
    %v827 = vpop.f32.mrf.mxu0
    %828 = vmatprep.mubr.f32.mxu0 0.0
    %829 = vmatmul.mubr.f32.gmra.mxu0 %v737
    %v830 = vpop.f32.mrf.mxu0
    %v831 = vadd.f32 %v728, %v830
    %v832 = vpop.f32.mrf.mxu0
    %833 = vmatprep.mubr.f32.mxu0 0.0
    %834 = vmatmul.mubr.f32.gmra.mxu0 %v740
    %v835 = vpop.f32.mrf.mxu0
    %v836 = vadd.f32 %v728, %v835
    %v837 = vpop.f32.mrf.mxu0
    %838 = vmatprep.mubr.f32.mxu0 0.0
    %839 = vmatmul.mubr.f32.gmra.mxu0 %v743
    %v840 = vpop.f32.mrf.mxu0
    %v841 = vadd.f32 %v728, %v840
    %v842 = vpop.f32.mrf.mxu0
    %843 = vmatprep.mubr.f32.mxu0 0.0
    %844 = vmatmul.mubr.f32.gmra.mxu0 %v746
    %v845 = vpop.f32.mrf.mxu0
    %v846 = vadd.f32 %v728, %v845
    %v847 = vpop.f32.mrf.mxu0
    %848 = vmatprep.mubr.f32.mxu0 0.0
    %849 = vmatmul.mubr.f32.gmra.mxu0 %v749
    %v850 = vpop.f32.mrf.mxu0
    %v851 = vadd.f32 %v728, %v850
    %v852 = vpop.f32.mrf.mxu0
    %853 = vmatprep.mubr.f32.mxu0 0.0
    %854 = vmatmul.mubr.f32.gmra.mxu0 %v752
    %v855 = vpop.f32.mrf.mxu0
    %v856 = vadd.f32 %v728, %v855
    %v857 = vpop.f32.mrf.mxu0
    %858 = vdwg.mxu0
    %859 = vst [vmem:[%s11] sm:$0xff] %v821
    %860 = vst [vmem:[%s11 + $0x8] sm:$0xff] %v826
    %861 = vst [vmem:[%s11 + $0x10] sm:$0xff] %v831
    %862 = vst [vmem:[%s11 + $0x18] sm:$0xff] %v836
    %863 = vst [vmem:[%s11 + $0x20] sm:$0xff] %v841
    %864 = vst [vmem:[%s11 + $0x28] sm:$0xff] %v846
    %865 = vst [vmem:[%s11 + $0x30] sm:$0xff] %v851
    %866 = vst [vmem:[%s11 + $0x38] sm:$0xff] %v856
  $region53: #{gcn_classification_weighted_forward.3} parent=0 // pred_fallthru
    _
  // Predicated region
  $region54: #{gcn_classification_weighted_forward.3} parent=0 // pred_check
    _
  $region55: #{gcn_classification_weighted_forward.3} parent=0 // pred_check_branch
    %868 = sbr.rel (0) target = $region57
  $region56: #{gcn_classification_weighted_forward.3} parent=0 // pred_region
    _
  $region57: #{gcn_classification_weighted_forward.3} parent=0 // pred_fallthru
    _
  // Predicated region
  $region58: #{gcn_classification_weighted_forward.3} parent=0 // pred_check
    _
  $region59: #{gcn_classification_weighted_forward.3} parent=0 // pred_check_branch
    %870 = sbr.rel (0) target = $region61
  $region60: #{gcn_classification_weighted_forward.3} parent=0 // pred_region
    _
  $region61: #{gcn_classification_weighted_forward.3} parent=0 // pred_fallthru
    _

</llo_original>
